<compile_context>
chip_gen: v5e
topology: v5e:2x2
jax: 0.10.0
libtpu: 0.0.40
codegen_flags: <defaults>
</compile_context>

<pallas_src>
import functools

import numpy as np
import jax
import jax.numpy as jnp
from jax import lax
from jax.experimental import pallas as pl
from jax.experimental.pallas import tpu as pltpu


class WalkerAlias:
    """Chainer's WalkerAlias (verbatim port, numpy / host only)."""

    def __init__(self, probs):
        prob = np.array(probs, np.float32)
        prob /= np.sum(prob)
        threshold = np.ndarray(len(probs), np.float32)
        values = np.ndarray(len(probs) * 2, np.int32)
        il, ir = (0, 0)
        pairs = list(zip(prob, range(len(probs))))
        pairs.sort()
        for prob, i in pairs:
            p = prob * len(probs)
            while p > 1 and ir < il:
                values[ir * 2 + 1] = i
                p -= 1.0 - threshold[ir]
                ir += 1
            threshold[il] = p
            values[il * 2] = i
            il += 1
        for i in range(ir, len(probs)):
            values[i * 2 + 1] = 0
        assert (values < len(threshold)).all()
        self.threshold = threshold
        self.values = values

    def sample(self, shape):
        ps = np.random.uniform(0, 1, shape)
        pb = ps * len(self.threshold)
        index = pb.astype(np.int32)
        left_right = (self.threshold[index] < pb - index).astype(np.int32)
        return self.values[index * 2 + left_right]


def _logsigmoid(x):
    # numerically stable log(sigmoid(x)) = min(x, 0) - log1p(exp(-|x|))
    return jnp.minimum(x, 0.0) - jnp.log1p(jnp.exp(-jnp.abs(x)))


def _neg_sampling_kernel(pos_idx_ref, neg_idx_ref,     # scalar prefetch (SMEM)
                         ctx_ref, w_ref,               # inputs (VMEM)
                         out_ref,                      # output (per-tile partial)
                         emb_buf,                      # scratch (VMEM)
                         *, tile_m, n_neg, m_total, static_gather):
    base = pl.program_id(0) * tile_m

    def gather_rows(idx_at):
        """Gather W[idx_at(r)] into emb_buf[r] for r in [0, tile_m)."""
        if static_gather:
            # Small tile: fully unrolled, static store offsets (lowest risk).
            for r in range(tile_m):
                row = idx_at(r)
                emb_buf[pl.ds(r, 1), :] = w_ref[pl.ds(row, 1), :]
        else:
            # Large tile: partially-unrolled fori_loop keeps code compact while
            # still giving the scheduler visibility to overlap the row loads.
            def body(r, carry):
                row = idx_at(r)
                emb_buf[pl.ds(r, 1), :] = w_ref[pl.ds(row, 1), :]
                return carry
            lax.fori_loop(0, tile_m, body, 0, unroll=8)

    def dot_with_ctx():
        # Re-read ctx from VMEM per use (cheap vld) instead of holding a large
        # tile live in vregs across all N+1 uses.
        return jnp.sum(emb_buf[...] * ctx_ref[...], axis=-1, keepdims=True)

    # --- positive term -------------------------------------------------------
    gather_rows(lambda r: pos_idx_ref[base + r])
    acc = _logsigmoid(dot_with_ctx())                       # (tile_m, 1)

    # --- negative terms: reuse the same ctx tile for every negative sample ---
    for n in range(n_neg):
        gather_rows(lambda r, n=n: neg_idx_ref[(base + r) * n_neg + n])
        acc = acc + _logsigmoid(-dot_with_ctx())

    # Mask rows only present due to M-axis tile padding; single XLU reduction.
    row_ids = base + lax.broadcasted_iota(jnp.int32, (tile_m, 1), 0)
    total = jnp.sum(jnp.where(row_ids < m_total, acc, 0.0))

    # lane-dense per-tile partial output; wrapper reduces out[:, 0, 0]
    out_ref[...] = jnp.full(out_ref.shape, -total, dtype=out_ref.dtype)


def negative_sampling_loss(W, sentence, context, neg_samples, *, tile_m=256):
    """W: (V, E) f32, sentence: (B, S) i32, context: (B, S, E) f32,
    neg_samples: (B, S, N) i32  ->  scalar f32 loss."""
    B, S = sentence.shape
    V, E = W.shape
    N = neg_samples.shape[-1]
    M = B * S

    E_pad = ((E + 127) // 128) * 128
    # Clamp tile_m to the problem size and keep it a multiple of 8.
    tile_m = max(8, min(int(tile_m), ((M + 7) // 8) * 8))
    tile_m = ((tile_m + 7) // 8) * 8
    M_pad = ((M + tile_m - 1) // tile_m) * tile_m
    num_tiles = M_pad // tile_m

    w_bytes = V * E_pad * 4
    # TODO(synk): tables larger than ~48 MiB need an HBM-resident W path
    # (memory_space=pl.ANY + double-buffered row-gather DMAs, one semaphore
    # per buffer); not implemented here.
    assert w_bytes <= 48 * 1024 * 1024, "embedding table too large for VMEM-resident kernel"
    # TODO(synk): for very large B*S*N, deliver indices via per-tile SMEM
    # BlockSpecs instead of whole-array scalar prefetch (SMEM capacity).
    # TODO(synk): on v6e/v7x, bf16 storage of W/ctx would halve VMEM and DMA
    # bytes (upcast to f32 in-kernel before the reduce).

    # Zero-padding E leaves every dot product unchanged; padded M rows are
    # masked inside the kernel.
    W_p = jnp.zeros((V, E_pad), jnp.float32).at[:, :E].set(W.astype(jnp.float32))
    ctx = jnp.zeros((M_pad, E_pad), jnp.float32).at[:M, :E].set(
        context.reshape(M, E).astype(jnp.float32))
    pos_idx = jnp.zeros((M_pad,), jnp.int32).at[:M].set(
        sentence.reshape(M).astype(jnp.int32))
    neg_idx = jnp.zeros((M_pad, N), jnp.int32).at[:M].set(
        neg_samples.reshape(M, N).astype(jnp.int32)).reshape(M_pad * N)

    kernel = functools.partial(
        _neg_sampling_kernel,
        tile_m=tile_m, n_neg=N, m_total=M,
        static_gather=(tile_m <= 32))

    # VMEM budget: resident W (assume 2 pipeline buffers), double-buffered ctx
    # tile, gather scratch, output slab.  Leave 2x headroom, cap at 100 MiB.
    approx_vmem = (2 * w_bytes
                   + 2 * tile_m * E_pad * 4     # ctx double-buffer
                   + tile_m * E_pad * 4         # emb_buf scratch
                   + 2 * 8 * 128 * 4)           # output blocks
    vmem_limit = int(min(100 * 1024 * 1024,
                         max(32 * 1024 * 1024, 2 * approx_vmem)))

    grid_spec = pltpu.PrefetchScalarGridSpec(
        num_scalar_prefetch=2,
        grid=(num_tiles,),
        in_specs=[
            pl.BlockSpec((tile_m, E_pad), lambda i, pos, neg: (i, 0)),  # ctx tile
            pl.BlockSpec((V, E_pad), lambda i, pos, neg: (0, 0)),       # W resident in VMEM
        ],
        out_specs=pl.BlockSpec((1, 8, 128), lambda i, pos, neg: (i, 0, 0)),
        scratch_shapes=[
            pltpu.VMEM((tile_m, E_pad), jnp.float32),   # gathered embedding rows
        ],
    )

    partials = pl.pallas_call(
        kernel,
        out_shape=jax.ShapeDtypeStruct((num_tiles, 8, 128), jnp.float32),
        grid_spec=grid_spec,
        compiler_params=pltpu.CompilerParams(
            dimension_semantics=("parallel",),
            vmem_limit_bytes=vmem_limit),
    )(pos_idx, neg_idx, ctx, W_p)

    return jnp.sum(partials[:, 0, 0])


def reference_loss(W, sentence, context, neg_samples):
    emb = W[sentence]                                              # (B, S, E)
    pos_loss = jax.nn.log_sigmoid(jnp.sum(emb * context, axis=2))  # (B, S)
    neg_emb = W[neg_samples]                                       # (B, S, N, E)
    neg_loss = jax.nn.log_sigmoid(
        jnp.sum(-neg_emb * context[:, :, None, :], axis=3)).sum(2)
    return -(pos_loss + neg_loss).sum()


if __name__ == "__main__":
    # Small, deterministic shapes consistent with the module's forward.
    V, E = 64, 32          # vocab size, embed_size
    B, S, N = 2, 8, 4      # batch, seq_len, n_negatives
    power = 0.75
    ignore_index = 0

    # Host-side negative sampler (same construction as the PyTorch module).
    counter = list(range(1, V + 1))
    sampler = WalkerAlias(np.power(counter, power))
    np.random.seed(0)
    neg_samples = jnp.asarray(sampler.sample((B, S, N)).astype(np.int32))

    # Deterministic parameters / inputs.  The module zeroes W at init; we use
    # a deterministic random W (padding row zeroed, mimicking padding_idx) so
    # the kernel computes something non-trivial.
    key = jax.random.PRNGKey(0)
    k_w, k_c, k_s = jax.random.split(key, 3)
    W = jax.random.normal(k_w, (V, E), jnp.float32) * 0.1
    W = W.at[ignore_index].set(0.0)
    context = jax.random.normal(k_c, (B, S, E), jnp.float32)
    sentence = jax.random.randint(k_s, (B, S), 0, V, jnp.int32)

    loss = negative_sampling_loss(W, sentence, context, neg_samples)
    loss = jax.block_until_ready(loss)

    ref = reference_loss(W, sentence, context, neg_samples)
    np.testing.assert_allclose(np.asarray(loss), np.asarray(ref),
                               rtol=1e-4, atol=1e-4)
    print("KERNEL_OK")
</pallas_src>

<mosaic_0001>
module attributes {stable_mosaic.version = 11 : i64} {
  func.func @_neg_sampling_kernel(%arg0: i32, %arg1: memref<16xi32, #tpu.memory_space<smem>>, %arg2: memref<64xi32, #tpu.memory_space<smem>>, %arg3: memref<16x128xf32, #tpu.memory_space<vmem>>, %arg4: memref<64x128xf32, #tpu.memory_space<vmem>>, %arg5: memref<1x8x128xf32, #tpu.memory_space<vmem>>, %arg6: memref<16x128xf32, #tpu.memory_space<vmem>>) attributes {dimension_semantics = [#tpu.dimension_semantics<parallel>], iteration_bounds = array<i64: 1>, scalar_prefetch = 2 : i64, scratch_operands = 1 : i64, tpu.core_type = #tpu.core_type<tc>, window_params = [{transform_indices = @transform_0, window_bounds = array<i64: 16, 128>}, {pipeline_mode = #tpu.pipeline_mode<synchronous>, transform_indices = @transform_1, window_bounds = array<i64: 64, 128>}, {transform_indices = @transform_2, window_bounds = array<i64: 1, 8, 128>}]} {
    %c16_i32 = arith.constant 16 : i32
    %0 = arith.muli %arg0, %c16_i32 : i32
    %c0_i32 = arith.constant 0 : i32
    %1 = arith.addi %0, %c0_i32 : i32
    %2 = arith.index_cast %1 : i32 to index
    %3 = memref.load %arg1[%2] : memref<16xi32, #tpu.memory_space<smem>>
    %4 = arith.index_cast %3 : i32 to index
    %c0 = arith.constant 0 : index
    %5 = vector.load %arg4[%4, %c0] : memref<64x128xf32, #tpu.memory_space<vmem>>, vector<1x128xf32>
    %c0_0 = arith.constant 0 : index
    %c0_1 = arith.constant 0 : index
    %6 = vector.load %arg6[%c0_0, %c0_1] : memref<16x128xf32, #tpu.memory_space<vmem>>, vector<1x128xf32>
    tpu.vector_store %arg6[%c0_0, %c0_1], %5 {strides = array<i32>} : memref<16x128xf32, #tpu.memory_space<vmem>>, vector<1x128xf32>,
    %c1_i32 = arith.constant 1 : i32
    %7 = arith.addi %0, %c1_i32 : i32
    %8 = arith.index_cast %7 : i32 to index
    %9 = memref.load %arg1[%8] : memref<16xi32, #tpu.memory_space<smem>>
    %10 = arith.index_cast %9 : i32 to index
    %c0_2 = arith.constant 0 : index
    %11 = vector.load %arg4[%10, %c0_2] : memref<64x128xf32, #tpu.memory_space<vmem>>, vector<1x128xf32>
    %c1 = arith.constant 1 : index
    %c0_3 = arith.constant 0 : index
    %12 = vector.load %arg6[%c1, %c0_3] : memref<16x128xf32, #tpu.memory_space<vmem>>, vector<1x128xf32>
    tpu.vector_store %arg6[%c1, %c0_3], %11 {strides = array<i32>} : memref<16x128xf32, #tpu.memory_space<vmem>>, vector<1x128xf32>,
    %c2_i32 = arith.constant 2 : i32
    %13 = arith.addi %0, %c2_i32 : i32
    %14 = arith.index_cast %13 : i32 to index
    %15 = memref.load %arg1[%14] : memref<16xi32, #tpu.memory_space<smem>>
    %16 = arith.index_cast %15 : i32 to index
    %c0_4 = arith.constant 0 : index
    %17 = vector.load %arg4[%16, %c0_4] : memref<64x128xf32, #tpu.memory_space<vmem>>, vector<1x128xf32>
    %c2 = arith.constant 2 : index
    %c0_5 = arith.constant 0 : index
    %18 = vector.load %arg6[%c2, %c0_5] : memref<16x128xf32, #tpu.memory_space<vmem>>, vector<1x128xf32>
    tpu.vector_store %arg6[%c2, %c0_5], %17 {strides = array<i32>} : memref<16x128xf32, #tpu.memory_space<vmem>>, vector<1x128xf32>,
    %c3_i32 = arith.constant 3 : i32
    %19 = arith.addi %0, %c3_i32 : i32
    %20 = arith.index_cast %19 : i32 to index
    %21 = memref.load %arg1[%20] : memref<16xi32, #tpu.memory_space<smem>>
    %22 = arith.index_cast %21 : i32 to index
    %c0_6 = arith.constant 0 : index
    %23 = vector.load %arg4[%22, %c0_6] : memref<64x128xf32, #tpu.memory_space<vmem>>, vector<1x128xf32>
    %c3 = arith.constant 3 : index
    %c0_7 = arith.constant 0 : index
    %24 = vector.load %arg6[%c3, %c0_7] : memref<16x128xf32, #tpu.memory_space<vmem>>, vector<1x128xf32>
    tpu.vector_store %arg6[%c3, %c0_7], %23 {strides = array<i32>} : memref<16x128xf32, #tpu.memory_space<vmem>>, vector<1x128xf32>,
    %c4_i32 = arith.constant 4 : i32
    %25 = arith.addi %0, %c4_i32 : i32
    %26 = arith.index_cast %25 : i32 to index
    %27 = memref.load %arg1[%26] : memref<16xi32, #tpu.memory_space<smem>>
    %28 = arith.index_cast %27 : i32 to index
    %c0_8 = arith.constant 0 : index
    %29 = vector.load %arg4[%28, %c0_8] : memref<64x128xf32, #tpu.memory_space<vmem>>, vector<1x128xf32>
    %c4 = arith.constant 4 : index
    %c0_9 = arith.constant 0 : index
    %30 = vector.load %arg6[%c4, %c0_9] : memref<16x128xf32, #tpu.memory_space<vmem>>, vector<1x128xf32>
    tpu.vector_store %arg6[%c4, %c0_9], %29 {strides = array<i32>} : memref<16x128xf32, #tpu.memory_space<vmem>>, vector<1x128xf32>,
    %c5_i32 = arith.constant 5 : i32
    %31 = arith.addi %0, %c5_i32 : i32
    %32 = arith.index_cast %31 : i32 to index
    %33 = memref.load %arg1[%32] : memref<16xi32, #tpu.memory_space<smem>>
    %34 = arith.index_cast %33 : i32 to index
    %c0_10 = arith.constant 0 : index
    %35 = vector.load %arg4[%34, %c0_10] : memref<64x128xf32, #tpu.memory_space<vmem>>, vector<1x128xf32>
    %c5 = arith.constant 5 : index
    %c0_11 = arith.constant 0 : index
    %36 = vector.load %arg6[%c5, %c0_11] : memref<16x128xf32, #tpu.memory_space<vmem>>, vector<1x128xf32>
    tpu.vector_store %arg6[%c5, %c0_11], %35 {strides = array<i32>} : memref<16x128xf32, #tpu.memory_space<vmem>>, vector<1x128xf32>,
    %c6_i32 = arith.constant 6 : i32
    %37 = arith.addi %0, %c6_i32 : i32
    %38 = arith.index_cast %37 : i32 to index
    %39 = memref.load %arg1[%38] : memref<16xi32, #tpu.memory_space<smem>>
    %40 = arith.index_cast %39 : i32 to index
    %c0_12 = arith.constant 0 : index
    %41 = vector.load %arg4[%40, %c0_12] : memref<64x128xf32, #tpu.memory_space<vmem>>, vector<1x128xf32>
    %c6 = arith.constant 6 : index
    %c0_13 = arith.constant 0 : index
    %42 = vector.load %arg6[%c6, %c0_13] : memref<16x128xf32, #tpu.memory_space<vmem>>, vector<1x128xf32>
    tpu.vector_store %arg6[%c6, %c0_13], %41 {strides = array<i32>} : memref<16x128xf32, #tpu.memory_space<vmem>>, vector<1x128xf32>,
    %c7_i32 = arith.constant 7 : i32
    %43 = arith.addi %0, %c7_i32 : i32
    %44 = arith.index_cast %43 : i32 to index
    %45 = memref.load %arg1[%44] : memref<16xi32, #tpu.memory_space<smem>>
    %46 = arith.index_cast %45 : i32 to index
    %c0_14 = arith.constant 0 : index
    %47 = vector.load %arg4[%46, %c0_14] : memref<64x128xf32, #tpu.memory_space<vmem>>, vector<1x128xf32>
    %c7 = arith.constant 7 : index
    %c0_15 = arith.constant 0 : index
    %48 = vector.load %arg6[%c7, %c0_15] : memref<16x128xf32, #tpu.memory_space<vmem>>, vector<1x128xf32>
    tpu.vector_store %arg6[%c7, %c0_15], %47 {strides = array<i32>} : memref<16x128xf32, #tpu.memory_space<vmem>>, vector<1x128xf32>,
    %c8_i32 = arith.constant 8 : i32
    %49 = arith.addi %0, %c8_i32 : i32
    %50 = arith.index_cast %49 : i32 to index
    %51 = memref.load %arg1[%50] : memref<16xi32, #tpu.memory_space<smem>>
    %52 = arith.index_cast %51 : i32 to index
    %c0_16 = arith.constant 0 : index
    %53 = vector.load %arg4[%52, %c0_16] : memref<64x128xf32, #tpu.memory_space<vmem>>, vector<1x128xf32>
    %c8 = arith.constant 8 : index
    %c0_17 = arith.constant 0 : index
    %54 = vector.load %arg6[%c8, %c0_17] : memref<16x128xf32, #tpu.memory_space<vmem>>, vector<1x128xf32>
    tpu.vector_store %arg6[%c8, %c0_17], %53 {strides = array<i32>} : memref<16x128xf32, #tpu.memory_space<vmem>>, vector<1x128xf32>,
    %c9_i32 = arith.constant 9 : i32
    %55 = arith.addi %0, %c9_i32 : i32
    %56 = arith.index_cast %55 : i32 to index
    %57 = memref.load %arg1[%56] : memref<16xi32, #tpu.memory_space<smem>>
    %58 = arith.index_cast %57 : i32 to index
    %c0_18 = arith.constant 0 : index
    %59 = vector.load %arg4[%58, %c0_18] : memref<64x128xf32, #tpu.memory_space<vmem>>, vector<1x128xf32>
    %c9 = arith.constant 9 : index
    %c0_19 = arith.constant 0 : index
    %60 = vector.load %arg6[%c9, %c0_19] : memref<16x128xf32, #tpu.memory_space<vmem>>, vector<1x128xf32>
    tpu.vector_store %arg6[%c9, %c0_19], %59 {strides = array<i32>} : memref<16x128xf32, #tpu.memory_space<vmem>>, vector<1x128xf32>,
    %c10_i32 = arith.constant 10 : i32
    %61 = arith.addi %0, %c10_i32 : i32
    %62 = arith.index_cast %61 : i32 to index
    %63 = memref.load %arg1[%62] : memref<16xi32, #tpu.memory_space<smem>>
    %64 = arith.index_cast %63 : i32 to index
    %c0_20 = arith.constant 0 : index
    %65 = vector.load %arg4[%64, %c0_20] : memref<64x128xf32, #tpu.memory_space<vmem>>, vector<1x128xf32>
    %c10 = arith.constant 10 : index
    %c0_21 = arith.constant 0 : index
    %66 = vector.load %arg6[%c10, %c0_21] : memref<16x128xf32, #tpu.memory_space<vmem>>, vector<1x128xf32>
    tpu.vector_store %arg6[%c10, %c0_21], %65 {strides = array<i32>} : memref<16x128xf32, #tpu.memory_space<vmem>>, vector<1x128xf32>,
    %c11_i32 = arith.constant 11 : i32
    %67 = arith.addi %0, %c11_i32 : i32
    %68 = arith.index_cast %67 : i32 to index
    %69 = memref.load %arg1[%68] : memref<16xi32, #tpu.memory_space<smem>>
    %70 = arith.index_cast %69 : i32 to index
    %c0_22 = arith.constant 0 : index
    %71 = vector.load %arg4[%70, %c0_22] : memref<64x128xf32, #tpu.memory_space<vmem>>, vector<1x128xf32>
    %c11 = arith.constant 11 : index
    %c0_23 = arith.constant 0 : index
    %72 = vector.load %arg6[%c11, %c0_23] : memref<16x128xf32, #tpu.memory_space<vmem>>, vector<1x128xf32>
    tpu.vector_store %arg6[%c11, %c0_23], %71 {strides = array<i32>} : memref<16x128xf32, #tpu.memory_space<vmem>>, vector<1x128xf32>,
    %c12_i32 = arith.constant 12 : i32
    %73 = arith.addi %0, %c12_i32 : i32
    %74 = arith.index_cast %73 : i32 to index
    %75 = memref.load %arg1[%74] : memref<16xi32, #tpu.memory_space<smem>>
    %76 = arith.index_cast %75 : i32 to index
    %c0_24 = arith.constant 0 : index
    %77 = vector.load %arg4[%76, %c0_24] : memref<64x128xf32, #tpu.memory_space<vmem>>, vector<1x128xf32>
    %c12 = arith.constant 12 : index
    %c0_25 = arith.constant 0 : index
    %78 = vector.load %arg6[%c12, %c0_25] : memref<16x128xf32, #tpu.memory_space<vmem>>, vector<1x128xf32>
    tpu.vector_store %arg6[%c12, %c0_25], %77 {strides = array<i32>} : memref<16x128xf32, #tpu.memory_space<vmem>>, vector<1x128xf32>,
    %c13_i32 = arith.constant 13 : i32
    %79 = arith.addi %0, %c13_i32 : i32
    %80 = arith.index_cast %79 : i32 to index
    %81 = memref.load %arg1[%80] : memref<16xi32, #tpu.memory_space<smem>>
    %82 = arith.index_cast %81 : i32 to index
    %c0_26 = arith.constant 0 : index
    %83 = vector.load %arg4[%82, %c0_26] : memref<64x128xf32, #tpu.memory_space<vmem>>, vector<1x128xf32>
    %c13 = arith.constant 13 : index
    %c0_27 = arith.constant 0 : index
    %84 = vector.load %arg6[%c13, %c0_27] : memref<16x128xf32, #tpu.memory_space<vmem>>, vector<1x128xf32>
    tpu.vector_store %arg6[%c13, %c0_27], %83 {strides = array<i32>} : memref<16x128xf32, #tpu.memory_space<vmem>>, vector<1x128xf32>,
    %c14_i32 = arith.constant 14 : i32
    %85 = arith.addi %0, %c14_i32 : i32
    %86 = arith.index_cast %85 : i32 to index
    %87 = memref.load %arg1[%86] : memref<16xi32, #tpu.memory_space<smem>>
    %88 = arith.index_cast %87 : i32 to index
    %c0_28 = arith.constant 0 : index
    %89 = vector.load %arg4[%88, %c0_28] : memref<64x128xf32, #tpu.memory_space<vmem>>, vector<1x128xf32>
    %c14 = arith.constant 14 : index
    %c0_29 = arith.constant 0 : index
    %90 = vector.load %arg6[%c14, %c0_29] : memref<16x128xf32, #tpu.memory_space<vmem>>, vector<1x128xf32>
    tpu.vector_store %arg6[%c14, %c0_29], %89 {strides = array<i32>} : memref<16x128xf32, #tpu.memory_space<vmem>>, vector<1x128xf32>,
    %c15_i32 = arith.constant 15 : i32
    %91 = arith.addi %0, %c15_i32 : i32
    %92 = arith.index_cast %91 : i32 to index
    %93 = memref.load %arg1[%92] : memref<16xi32, #tpu.memory_space<smem>>
    %94 = arith.index_cast %93 : i32 to index
    %c0_30 = arith.constant 0 : index
    %95 = vector.load %arg4[%94, %c0_30] : memref<64x128xf32, #tpu.memory_space<vmem>>, vector<1x128xf32>
    %c15 = arith.constant 15 : index
    %c0_31 = arith.constant 0 : index
    %96 = vector.load %arg6[%c15, %c0_31] : memref<16x128xf32, #tpu.memory_space<vmem>>, vector<1x128xf32>
    tpu.vector_store %arg6[%c15, %c0_31], %95 {strides = array<i32>} : memref<16x128xf32, #tpu.memory_space<vmem>>, vector<1x128xf32>,
    %c0_32 = arith.constant 0 : index
    %c0_33 = arith.constant 0 : index
    %97 = vector.load %arg6[%c0_32, %c0_33] : memref<16x128xf32, #tpu.memory_space<vmem>>, vector<16x128xf32>
    %c0_34 = arith.constant 0 : index
    %c0_35 = arith.constant 0 : index
    %98 = vector.load %arg3[%c0_34, %c0_35] : memref<16x128xf32, #tpu.memory_space<vmem>>, vector<16x128xf32>
    %99 = arith.mulf %97, %98 : vector<16x128xf32>
    %cst = arith.constant dense<0.000000e+00> : vector<16xf32>
    %100 = vector.multi_reduction <add>, %99, %cst [1] : vector<16x128xf32> to vector<16xf32>
    %101 = vector.shape_cast %100 : vector<16xf32> to vector<16x1xf32>
    %cst_36 = arith.constant 0.000000e+00 : f32
    %102 = vector.broadcast %cst_36 : f32 to vector<16x1xf32>
    %103 = arith.minimumf %101, %102 : vector<16x1xf32>
    %104 = math.absf %101 : vector<16x1xf32>
    %cst_37 = arith.constant 0.000000e+00 : f32
    %105 = vector.broadcast %cst_37 : f32 to vector<16x1xf32>
    %106 = arith.subf %105, %104 : vector<16x1xf32>
    %107 = math.exp %106 : vector<16x1xf32>
    %108 = math.log1p %107 : vector<16x1xf32>
    %109 = arith.subf %103, %108 : vector<16x1xf32>
    %c0_i32_38 = arith.constant 0 : i32
    %110 = arith.addi %0, %c0_i32_38 : i32
    %c4_i32_39 = arith.constant 4 : i32
    %111 = arith.muli %110, %c4_i32_39 : i32
    %c0_i32_40 = arith.constant 0 : i32
    %112 = arith.addi %111, %c0_i32_40 : i32
    %113 = arith.index_cast %112 : i32 to index
    %114 = memref.load %arg2[%113] : memref<64xi32, #tpu.memory_space<smem>>
    %115 = arith.index_cast %114 : i32 to index
    %c0_41 = arith.constant 0 : index
    %116 = vector.load %arg4[%115, %c0_41] : memref<64x128xf32, #tpu.memory_space<vmem>>, vector<1x128xf32>
    %c0_42 = arith.constant 0 : index
    %c0_43 = arith.constant 0 : index
    %117 = vector.load %arg6[%c0_42, %c0_43] : memref<16x128xf32, #tpu.memory_space<vmem>>, vector<1x128xf32>
    tpu.vector_store %arg6[%c0_42, %c0_43], %116 {strides = array<i32>} : memref<16x128xf32, #tpu.memory_space<vmem>>, vector<1x128xf32>,
    %c1_i32_44 = arith.constant 1 : i32
    %118 = arith.addi %0, %c1_i32_44 : i32
    %c4_i32_45 = arith.constant 4 : i32
    %119 = arith.muli %118, %c4_i32_45 : i32
    %c0_i32_46 = arith.constant 0 : i32
    %120 = arith.addi %119, %c0_i32_46 : i32
    %121 = arith.index_cast %120 : i32 to index
    %122 = memref.load %arg2[%121] : memref<64xi32, #tpu.memory_space<smem>>
    %123 = arith.index_cast %122 : i32 to index
    %c0_47 = arith.constant 0 : index
    %124 = vector.load %arg4[%123, %c0_47] : memref<64x128xf32, #tpu.memory_space<vmem>>, vector<1x128xf32>
    %c1_48 = arith.constant 1 : index
    %c0_49 = arith.constant 0 : index
    %125 = vector.load %arg6[%c1_48, %c0_49] : memref<16x128xf32, #tpu.memory_space<vmem>>, vector<1x128xf32>
    tpu.vector_store %arg6[%c1_48, %c0_49], %124 {strides = array<i32>} : memref<16x128xf32, #tpu.memory_space<vmem>>, vector<1x128xf32>,
    %c2_i32_50 = arith.constant 2 : i32
    %126 = arith.addi %0, %c2_i32_50 : i32
    %c4_i32_51 = arith.constant 4 : i32
    %127 = arith.muli %126, %c4_i32_51 : i32
    %c0_i32_52 = arith.constant 0 : i32
    %128 = arith.addi %127, %c0_i32_52 : i32
    %129 = arith.index_cast %128 : i32 to index
    %130 = memref.load %arg2[%129] : memref<64xi32, #tpu.memory_space<smem>>
    %131 = arith.index_cast %130 : i32 to index
    %c0_53 = arith.constant 0 : index
    %132 = vector.load %arg4[%131, %c0_53] : memref<64x128xf32, #tpu.memory_space<vmem>>, vector<1x128xf32>
    %c2_54 = arith.constant 2 : index
    %c0_55 = arith.constant 0 : index
    %133 = vector.load %arg6[%c2_54, %c0_55] : memref<16x128xf32, #tpu.memory_space<vmem>>, vector<1x128xf32>
    tpu.vector_store %arg6[%c2_54, %c0_55], %132 {strides = array<i32>} : memref<16x128xf32, #tpu.memory_space<vmem>>, vector<1x128xf32>,
    %c3_i32_56 = arith.constant 3 : i32
    %134 = arith.addi %0, %c3_i32_56 : i32
    %c4_i32_57 = arith.constant 4 : i32
    %135 = arith.muli %134, %c4_i32_57 : i32
    %c0_i32_58 = arith.constant 0 : i32
    %136 = arith.addi %135, %c0_i32_58 : i32
    %137 = arith.index_cast %136 : i32 to index
    %138 = memref.load %arg2[%137] : memref<64xi32, #tpu.memory_space<smem>>
    %139 = arith.index_cast %138 : i32 to index
    %c0_59 = arith.constant 0 : index
    %140 = vector.load %arg4[%139, %c0_59] : memref<64x128xf32, #tpu.memory_space<vmem>>, vector<1x128xf32>
    %c3_60 = arith.constant 3 : index
    %c0_61 = arith.constant 0 : index
    %141 = vector.load %arg6[%c3_60, %c0_61] : memref<16x128xf32, #tpu.memory_space<vmem>>, vector<1x128xf32>
    tpu.vector_store %arg6[%c3_60, %c0_61], %140 {strides = array<i32>} : memref<16x128xf32, #tpu.memory_space<vmem>>, vector<1x128xf32>,
    %c4_i32_62 = arith.constant 4 : i32
    %142 = arith.addi %0, %c4_i32_62 : i32
    %c4_i32_63 = arith.constant 4 : i32
    %143 = arith.muli %142, %c4_i32_63 : i32
    %c0_i32_64 = arith.constant 0 : i32
    %144 = arith.addi %143, %c0_i32_64 : i32
    %145 = arith.index_cast %144 : i32 to index
    %146 = memref.load %arg2[%145] : memref<64xi32, #tpu.memory_space<smem>>
    %147 = arith.index_cast %146 : i32 to index
    %c0_65 = arith.constant 0 : index
    %148 = vector.load %arg4[%147, %c0_65] : memref<64x128xf32, #tpu.memory_space<vmem>>, vector<1x128xf32>
    %c4_66 = arith.constant 4 : index
    %c0_67 = arith.constant 0 : index
    %149 = vector.load %arg6[%c4_66, %c0_67] : memref<16x128xf32, #tpu.memory_space<vmem>>, vector<1x128xf32>
    tpu.vector_store %arg6[%c4_66, %c0_67], %148 {strides = array<i32>} : memref<16x128xf32, #tpu.memory_space<vmem>>, vector<1x128xf32>,
    %c5_i32_68 = arith.constant 5 : i32
    %150 = arith.addi %0, %c5_i32_68 : i32
    %c4_i32_69 = arith.constant 4 : i32
    %151 = arith.muli %150, %c4_i32_69 : i32
    %c0_i32_70 = arith.constant 0 : i32
    %152 = arith.addi %151, %c0_i32_70 : i32
    %153 = arith.index_cast %152 : i32 to index
    %154 = memref.load %arg2[%153] : memref<64xi32, #tpu.memory_space<smem>>
    %155 = arith.index_cast %154 : i32 to index
    %c0_71 = arith.constant 0 : index
    %156 = vector.load %arg4[%155, %c0_71] : memref<64x128xf32, #tpu.memory_space<vmem>>, vector<1x128xf32>
    %c5_72 = arith.constant 5 : index
    %c0_73 = arith.constant 0 : index
    %157 = vector.load %arg6[%c5_72, %c0_73] : memref<16x128xf32, #tpu.memory_space<vmem>>, vector<1x128xf32>
    tpu.vector_store %arg6[%c5_72, %c0_73], %156 {strides = array<i32>} : memref<16x128xf32, #tpu.memory_space<vmem>>, vector<1x128xf32>,
    %c6_i32_74 = arith.constant 6 : i32
    %158 = arith.addi %0, %c6_i32_74 : i32
    %c4_i32_75 = arith.constant 4 : i32
    %159 = arith.muli %158, %c4_i32_75 : i32
    %c0_i32_76 = arith.constant 0 : i32
    %160 = arith.addi %159, %c0_i32_76 : i32
    %161 = arith.index_cast %160 : i32 to index
    %162 = memref.load %arg2[%161] : memref<64xi32, #tpu.memory_space<smem>>
    %163 = arith.index_cast %162 : i32 to index
    %c0_77 = arith.constant 0 : index
    %164 = vector.load %arg4[%163, %c0_77] : memref<64x128xf32, #tpu.memory_space<vmem>>, vector<1x128xf32>
    %c6_78 = arith.constant 6 : index
    %c0_79 = arith.constant 0 : index
    %165 = vector.load %arg6[%c6_78, %c0_79] : memref<16x128xf32, #tpu.memory_space<vmem>>, vector<1x128xf32>
    tpu.vector_store %arg6[%c6_78, %c0_79], %164 {strides = array<i32>} : memref<16x128xf32, #tpu.memory_space<vmem>>, vector<1x128xf32>,
    %c7_i32_80 = arith.constant 7 : i32
    %166 = arith.addi %0, %c7_i32_80 : i32
    %c4_i32_81 = arith.constant 4 : i32
    %167 = arith.muli %166, %c4_i32_81 : i32
    %c0_i32_82 = arith.constant 0 : i32
    %168 = arith.addi %167, %c0_i32_82 : i32
    %169 = arith.index_cast %168 : i32 to index
    %170 = memref.load %arg2[%169] : memref<64xi32, #tpu.memory_space<smem>>
    %171 = arith.index_cast %170 : i32 to index
    %c0_83 = arith.constant 0 : index
    %172 = vector.load %arg4[%171, %c0_83] : memref<64x128xf32, #tpu.memory_space<vmem>>, vector<1x128xf32>
    %c7_84 = arith.constant 7 : index
    %c0_85 = arith.constant 0 : index
    %173 = vector.load %arg6[%c7_84, %c0_85] : memref<16x128xf32, #tpu.memory_space<vmem>>, vector<1x128xf32>
    tpu.vector_store %arg6[%c7_84, %c0_85], %172 {strides = array<i32>} : memref<16x128xf32, #tpu.memory_space<vmem>>, vector<1x128xf32>,
    %c8_i32_86 = arith.constant 8 : i32
    %174 = arith.addi %0, %c8_i32_86 : i32
    %c4_i32_87 = arith.constant 4 : i32
    %175 = arith.muli %174, %c4_i32_87 : i32
    %c0_i32_88 = arith.constant 0 : i32
    %176 = arith.addi %175, %c0_i32_88 : i32
    %177 = arith.index_cast %176 : i32 to index
    %178 = memref.load %arg2[%177] : memref<64xi32, #tpu.memory_space<smem>>
    %179 = arith.index_cast %178 : i32 to index
    %c0_89 = arith.constant 0 : index
    %180 = vector.load %arg4[%179, %c0_89] : memref<64x128xf32, #tpu.memory_space<vmem>>, vector<1x128xf32>
    %c8_90 = arith.constant 8 : index
    %c0_91 = arith.constant 0 : index
    %181 = vector.load %arg6[%c8_90, %c0_91] : memref<16x128xf32, #tpu.memory_space<vmem>>, vector<1x128xf32>
    tpu.vector_store %arg6[%c8_90, %c0_91], %180 {strides = array<i32>} : memref<16x128xf32, #tpu.memory_space<vmem>>, vector<1x128xf32>,
    %c9_i32_92 = arith.constant 9 : i32
    %182 = arith.addi %0, %c9_i32_92 : i32
    %c4_i32_93 = arith.constant 4 : i32
    %183 = arith.muli %182, %c4_i32_93 : i32
    %c0_i32_94 = arith.constant 0 : i32
    %184 = arith.addi %183, %c0_i32_94 : i32
    %185 = arith.index_cast %184 : i32 to index
    %186 = memref.load %arg2[%185] : memref<64xi32, #tpu.memory_space<smem>>
    %187 = arith.index_cast %186 : i32 to index
    %c0_95 = arith.constant 0 : index
    %188 = vector.load %arg4[%187, %c0_95] : memref<64x128xf32, #tpu.memory_space<vmem>>, vector<1x128xf32>
    %c9_96 = arith.constant 9 : index
    %c0_97 = arith.constant 0 : index
    %189 = vector.load %arg6[%c9_96, %c0_97] : memref<16x128xf32, #tpu.memory_space<vmem>>, vector<1x128xf32>
    tpu.vector_store %arg6[%c9_96, %c0_97], %188 {strides = array<i32>} : memref<16x128xf32, #tpu.memory_space<vmem>>, vector<1x128xf32>,
    %c10_i32_98 = arith.constant 10 : i32
    %190 = arith.addi %0, %c10_i32_98 : i32
    %c4_i32_99 = arith.constant 4 : i32
    %191 = arith.muli %190, %c4_i32_99 : i32
    %c0_i32_100 = arith.constant 0 : i32
    %192 = arith.addi %191, %c0_i32_100 : i32
    %193 = arith.index_cast %192 : i32 to index
    %194 = memref.load %arg2[%193] : memref<64xi32, #tpu.memory_space<smem>>
    %195 = arith.index_cast %194 : i32 to index
    %c0_101 = arith.constant 0 : index
    %196 = vector.load %arg4[%195, %c0_101] : memref<64x128xf32, #tpu.memory_space<vmem>>, vector<1x128xf32>
    %c10_102 = arith.constant 10 : index
    %c0_103 = arith.constant 0 : index
    %197 = vector.load %arg6[%c10_102, %c0_103] : memref<16x128xf32, #tpu.memory_space<vmem>>, vector<1x128xf32>
    tpu.vector_store %arg6[%c10_102, %c0_103], %196 {strides = array<i32>} : memref<16x128xf32, #tpu.memory_space<vmem>>, vector<1x128xf32>,
    %c11_i32_104 = arith.constant 11 : i32
    %198 = arith.addi %0, %c11_i32_104 : i32
    %c4_i32_105 = arith.constant 4 : i32
    %199 = arith.muli %198, %c4_i32_105 : i32
    %c0_i32_106 = arith.constant 0 : i32
    %200 = arith.addi %199, %c0_i32_106 : i32
    %201 = arith.index_cast %200 : i32 to index
    %202 = memref.load %arg2[%201] : memref<64xi32, #tpu.memory_space<smem>>
    %203 = arith.index_cast %202 : i32 to index
    %c0_107 = arith.constant 0 : index
    %204 = vector.load %arg4[%203, %c0_107] : memref<64x128xf32, #tpu.memory_space<vmem>>, vector<1x128xf32>
    %c11_108 = arith.constant 11 : index
    %c0_109 = arith.constant 0 : index
    %205 = vector.load %arg6[%c11_108, %c0_109] : memref<16x128xf32, #tpu.memory_space<vmem>>, vector<1x128xf32>
    tpu.vector_store %arg6[%c11_108, %c0_109], %204 {strides = array<i32>} : memref<16x128xf32, #tpu.memory_space<vmem>>, vector<1x128xf32>,
    %c12_i32_110 = arith.constant 12 : i32
    %206 = arith.addi %0, %c12_i32_110 : i32
    %c4_i32_111 = arith.constant 4 : i32
    %207 = arith.muli %206, %c4_i32_111 : i32
    %c0_i32_112 = arith.constant 0 : i32
    %208 = arith.addi %207, %c0_i32_112 : i32
    %209 = arith.index_cast %208 : i32 to index
    %210 = memref.load %arg2[%209] : memref<64xi32, #tpu.memory_space<smem>>
    %211 = arith.index_cast %210 : i32 to index
    %c0_113 = arith.constant 0 : index
    %212 = vector.load %arg4[%211, %c0_113] : memref<64x128xf32, #tpu.memory_space<vmem>>, vector<1x128xf32>
    %c12_114 = arith.constant 12 : index
    %c0_115 = arith.constant 0 : index
    %213 = vector.load %arg6[%c12_114, %c0_115] : memref<16x128xf32, #tpu.memory_space<vmem>>, vector<1x128xf32>
    tpu.vector_store %arg6[%c12_114, %c0_115], %212 {strides = array<i32>} : memref<16x128xf32, #tpu.memory_space<vmem>>, vector<1x128xf32>,
    %c13_i32_116 = arith.constant 13 : i32
    %214 = arith.addi %0, %c13_i32_116 : i32
    %c4_i32_117 = arith.constant 4 : i32
    %215 = arith.muli %214, %c4_i32_117 : i32
    %c0_i32_118 = arith.constant 0 : i32
    %216 = arith.addi %215, %c0_i32_118 : i32
    %217 = arith.index_cast %216 : i32 to index
    %218 = memref.load %arg2[%217] : memref<64xi32, #tpu.memory_space<smem>>
    %219 = arith.index_cast %218 : i32 to index
    %c0_119 = arith.constant 0 : index
    %220 = vector.load %arg4[%219, %c0_119] : memref<64x128xf32, #tpu.memory_space<vmem>>, vector<1x128xf32>
    %c13_120 = arith.constant 13 : index
    %c0_121 = arith.constant 0 : index
    %221 = vector.load %arg6[%c13_120, %c0_121] : memref<16x128xf32, #tpu.memory_space<vmem>>, vector<1x128xf32>
    tpu.vector_store %arg6[%c13_120, %c0_121], %220 {strides = array<i32>} : memref<16x128xf32, #tpu.memory_space<vmem>>, vector<1x128xf32>,
    %c14_i32_122 = arith.constant 14 : i32
    %222 = arith.addi %0, %c14_i32_122 : i32
    %c4_i32_123 = arith.constant 4 : i32
    %223 = arith.muli %222, %c4_i32_123 : i32
    %c0_i32_124 = arith.constant 0 : i32
    %224 = arith.addi %223, %c0_i32_124 : i32
    %225 = arith.index_cast %224 : i32 to index
    %226 = memref.load %arg2[%225] : memref<64xi32, #tpu.memory_space<smem>>
    %227 = arith.index_cast %226 : i32 to index
    %c0_125 = arith.constant 0 : index
    %228 = vector.load %arg4[%227, %c0_125] : memref<64x128xf32, #tpu.memory_space<vmem>>, vector<1x128xf32>
    %c14_126 = arith.constant 14 : index
    %c0_127 = arith.constant 0 : index
    %229 = vector.load %arg6[%c14_126, %c0_127] : memref<16x128xf32, #tpu.memory_space<vmem>>, vector<1x128xf32>
    tpu.vector_store %arg6[%c14_126, %c0_127], %228 {strides = array<i32>} : memref<16x128xf32, #tpu.memory_space<vmem>>, vector<1x128xf32>,
    %c15_i32_128 = arith.constant 15 : i32
    %230 = arith.addi %0, %c15_i32_128 : i32
    %c4_i32_129 = arith.constant 4 : i32
    %231 = arith.muli %230, %c4_i32_129 : i32
    %c0_i32_130 = arith.constant 0 : i32
    %232 = arith.addi %231, %c0_i32_130 : i32
    %233 = arith.index_cast %232 : i32 to index
    %234 = memref.load %arg2[%233] : memref<64xi32, #tpu.memory_space<smem>>
    %235 = arith.index_cast %234 : i32 to index
    %c0_131 = arith.constant 0 : index
    %236 = vector.load %arg4[%235, %c0_131] : memref<64x128xf32, #tpu.memory_space<vmem>>, vector<1x128xf32>
    %c15_132 = arith.constant 15 : index
    %c0_133 = arith.constant 0 : index
    %237 = vector.load %arg6[%c15_132, %c0_133] : memref<16x128xf32, #tpu.memory_space<vmem>>, vector<1x128xf32>
    tpu.vector_store %arg6[%c15_132, %c0_133], %236 {strides = array<i32>} : memref<16x128xf32, #tpu.memory_space<vmem>>, vector<1x128xf32>,
    %c0_134 = arith.constant 0 : index
    %c0_135 = arith.constant 0 : index
    %238 = vector.load %arg6[%c0_134, %c0_135] : memref<16x128xf32, #tpu.memory_space<vmem>>, vector<16x128xf32>
    %c0_136 = arith.constant 0 : index
    %c0_137 = arith.constant 0 : index
    %239 = vector.load %arg3[%c0_136, %c0_137] : memref<16x128xf32, #tpu.memory_space<vmem>>, vector<16x128xf32>
    %240 = arith.mulf %238, %239 : vector<16x128xf32>
    %cst_138 = arith.constant dense<0.000000e+00> : vector<16xf32>
    %241 = vector.multi_reduction <add>, %240, %cst_138 [1] : vector<16x128xf32> to vector<16xf32>
    %242 = vector.shape_cast %241 : vector<16xf32> to vector<16x1xf32>
    %cst_139 = arith.constant 0.000000e+00 : f32
    %243 = vector.broadcast %cst_139 : f32 to vector<16x1xf32>
    %244 = arith.subf %243, %242 : vector<16x1xf32>
    %cst_140 = arith.constant 0.000000e+00 : f32
    %245 = vector.broadcast %cst_140 : f32 to vector<16x1xf32>
    %246 = arith.minimumf %244, %245 : vector<16x1xf32>
    %247 = math.absf %244 : vector<16x1xf32>
    %cst_141 = arith.constant 0.000000e+00 : f32
    %248 = vector.broadcast %cst_141 : f32 to vector<16x1xf32>
    %249 = arith.subf %248, %247 : vector<16x1xf32>
    %250 = math.exp %249 : vector<16x1xf32>
    %251 = math.log1p %250 : vector<16x1xf32>
    %252 = arith.subf %246, %251 : vector<16x1xf32>
    %253 = arith.addf %109, %252 : vector<16x1xf32>
    %c0_i32_142 = arith.constant 0 : i32
    %254 = arith.addi %0, %c0_i32_142 : i32
    %c4_i32_143 = arith.constant 4 : i32
    %255 = arith.muli %254, %c4_i32_143 : i32
    %c1_i32_144 = arith.constant 1 : i32
    %256 = arith.addi %255, %c1_i32_144 : i32
    %257 = arith.index_cast %256 : i32 to index
    %258 = memref.load %arg2[%257] : memref<64xi32, #tpu.memory_space<smem>>
    %259 = arith.index_cast %258 : i32 to index
    %c0_145 = arith.constant 0 : index
    %260 = vector.load %arg4[%259, %c0_145] : memref<64x128xf32, #tpu.memory_space<vmem>>, vector<1x128xf32>
    %c0_146 = arith.constant 0 : index
    %c0_147 = arith.constant 0 : index
    %261 = vector.load %arg6[%c0_146, %c0_147] : memref<16x128xf32, #tpu.memory_space<vmem>>, vector<1x128xf32>
    tpu.vector_store %arg6[%c0_146, %c0_147], %260 {strides = array<i32>} : memref<16x128xf32, #tpu.memory_space<vmem>>, vector<1x128xf32>,
    %c1_i32_148 = arith.constant 1 : i32
    %262 = arith.addi %0, %c1_i32_148 : i32
    %c4_i32_149 = arith.constant 4 : i32
    %263 = arith.muli %262, %c4_i32_149 : i32
    %c1_i32_150 = arith.constant 1 : i32
    %264 = arith.addi %263, %c1_i32_150 : i32
    %265 = arith.index_cast %264 : i32 to index
    %266 = memref.load %arg2[%265] : memref<64xi32, #tpu.memory_space<smem>>
    %267 = arith.index_cast %266 : i32 to index
    %c0_151 = arith.constant 0 : index
    %268 = vector.load %arg4[%267, %c0_151] : memref<64x128xf32, #tpu.memory_space<vmem>>, vector<1x128xf32>
    %c1_152 = arith.constant 1 : index
    %c0_153 = arith.constant 0 : index
    %269 = vector.load %arg6[%c1_152, %c0_153] : memref<16x128xf32, #tpu.memory_space<vmem>>, vector<1x128xf32>
    tpu.vector_store %arg6[%c1_152, %c0_153], %268 {strides = array<i32>} : memref<16x128xf32, #tpu.memory_space<vmem>>, vector<1x128xf32>,
    %c2_i32_154 = arith.constant 2 : i32
    %270 = arith.addi %0, %c2_i32_154 : i32
    %c4_i32_155 = arith.constant 4 : i32
    %271 = arith.muli %270, %c4_i32_155 : i32
    %c1_i32_156 = arith.constant 1 : i32
    %272 = arith.addi %271, %c1_i32_156 : i32
    %273 = arith.index_cast %272 : i32 to index
    %274 = memref.load %arg2[%273] : memref<64xi32, #tpu.memory_space<smem>>
    %275 = arith.index_cast %274 : i32 to index
    %c0_157 = arith.constant 0 : index
    %276 = vector.load %arg4[%275, %c0_157] : memref<64x128xf32, #tpu.memory_space<vmem>>, vector<1x128xf32>
    %c2_158 = arith.constant 2 : index
    %c0_159 = arith.constant 0 : index
    %277 = vector.load %arg6[%c2_158, %c0_159] : memref<16x128xf32, #tpu.memory_space<vmem>>, vector<1x128xf32>
    tpu.vector_store %arg6[%c2_158, %c0_159], %276 {strides = array<i32>} : memref<16x128xf32, #tpu.memory_space<vmem>>, vector<1x128xf32>,
    %c3_i32_160 = arith.constant 3 : i32
    %278 = arith.addi %0, %c3_i32_160 : i32
    %c4_i32_161 = arith.constant 4 : i32
    %279 = arith.muli %278, %c4_i32_161 : i32
    %c1_i32_162 = arith.constant 1 : i32
    %280 = arith.addi %279, %c1_i32_162 : i32
    %281 = arith.index_cast %280 : i32 to index
    %282 = memref.load %arg2[%281] : memref<64xi32, #tpu.memory_space<smem>>
    %283 = arith.index_cast %282 : i32 to index
    %c0_163 = arith.constant 0 : index
    %284 = vector.load %arg4[%283, %c0_163] : memref<64x128xf32, #tpu.memory_space<vmem>>, vector<1x128xf32>
    %c3_164 = arith.constant 3 : index
    %c0_165 = arith.constant 0 : index
    %285 = vector.load %arg6[%c3_164, %c0_165] : memref<16x128xf32, #tpu.memory_space<vmem>>, vector<1x128xf32>
    tpu.vector_store %arg6[%c3_164, %c0_165], %284 {strides = array<i32>} : memref<16x128xf32, #tpu.memory_space<vmem>>, vector<1x128xf32>,
    %c4_i32_166 = arith.constant 4 : i32
    %286 = arith.addi %0, %c4_i32_166 : i32
    %c4_i32_167 = arith.constant 4 : i32
    %287 = arith.muli %286, %c4_i32_167 : i32
    %c1_i32_168 = arith.constant 1 : i32
    %288 = arith.addi %287, %c1_i32_168 : i32
    %289 = arith.index_cast %288 : i32 to index
    %290 = memref.load %arg2[%289] : memref<64xi32, #tpu.memory_space<smem>>
    %291 = arith.index_cast %290 : i32 to index
    %c0_169 = arith.constant 0 : index
    %292 = vector.load %arg4[%291, %c0_169] : memref<64x128xf32, #tpu.memory_space<vmem>>, vector<1x128xf32>
    %c4_170 = arith.constant 4 : index
    %c0_171 = arith.constant 0 : index
    %293 = vector.load %arg6[%c4_170, %c0_171] : memref<16x128xf32, #tpu.memory_space<vmem>>, vector<1x128xf32>
    tpu.vector_store %arg6[%c4_170, %c0_171], %292 {strides = array<i32>} : memref<16x128xf32, #tpu.memory_space<vmem>>, vector<1x128xf32>,
    %c5_i32_172 = arith.constant 5 : i32
    %294 = arith.addi %0, %c5_i32_172 : i32
    %c4_i32_173 = arith.constant 4 : i32
    %295 = arith.muli %294, %c4_i32_173 : i32
    %c1_i32_174 = arith.constant 1 : i32
    %296 = arith.addi %295, %c1_i32_174 : i32
    %297 = arith.index_cast %296 : i32 to index
    %298 = memref.load %arg2[%297] : memref<64xi32, #tpu.memory_space<smem>>
    %299 = arith.index_cast %298 : i32 to index
    %c0_175 = arith.constant 0 : index
    %300 = vector.load %arg4[%299, %c0_175] : memref<64x128xf32, #tpu.memory_space<vmem>>, vector<1x128xf32>
    %c5_176 = arith.constant 5 : index
    %c0_177 = arith.constant 0 : index
    %301 = vector.load %arg6[%c5_176, %c0_177] : memref<16x128xf32, #tpu.memory_space<vmem>>, vector<1x128xf32>
    tpu.vector_store %arg6[%c5_176, %c0_177], %300 {strides = array<i32>} : memref<16x128xf32, #tpu.memory_space<vmem>>, vector<1x128xf32>,
    %c6_i32_178 = arith.constant 6 : i32
    %302 = arith.addi %0, %c6_i32_178 : i32
    %c4_i32_179 = arith.constant 4 : i32
    %303 = arith.muli %302, %c4_i32_179 : i32
    %c1_i32_180 = arith.constant 1 : i32
    %304 = arith.addi %303, %c1_i32_180 : i32
    %305 = arith.index_cast %304 : i32 to index
    %306 = memref.load %arg2[%305] : memref<64xi32, #tpu.memory_space<smem>>
    %307 = arith.index_cast %306 : i32 to index
    %c0_181 = arith.constant 0 : index
    %308 = vector.load %arg4[%307, %c0_181] : memref<64x128xf32, #tpu.memory_space<vmem>>, vector<1x128xf32>
    %c6_182 = arith.constant 6 : index
    %c0_183 = arith.constant 0 : index
    %309 = vector.load %arg6[%c6_182, %c0_183] : memref<16x128xf32, #tpu.memory_space<vmem>>, vector<1x128xf32>
    tpu.vector_store %arg6[%c6_182, %c0_183], %308 {strides = array<i32>} : memref<16x128xf32, #tpu.memory_space<vmem>>, vector<1x128xf32>,
    %c7_i32_184 = arith.constant 7 : i32
    %310 = arith.addi %0, %c7_i32_184 : i32
    %c4_i32_185 = arith.constant 4 : i32
    %311 = arith.muli %310, %c4_i32_185 : i32
    %c1_i32_186 = arith.constant 1 : i32
    %312 = arith.addi %311, %c1_i32_186 : i32
    %313 = arith.index_cast %312 : i32 to index
    %314 = memref.load %arg2[%313] : memref<64xi32, #tpu.memory_space<smem>>
    %315 = arith.index_cast %314 : i32 to index
    %c0_187 = arith.constant 0 : index
    %316 = vector.load %arg4[%315, %c0_187] : memref<64x128xf32, #tpu.memory_space<vmem>>, vector<1x128xf32>
    %c7_188 = arith.constant 7 : index
    %c0_189 = arith.constant 0 : index
    %317 = vector.load %arg6[%c7_188, %c0_189] : memref<16x128xf32, #tpu.memory_space<vmem>>, vector<1x128xf32>
    tpu.vector_store %arg6[%c7_188, %c0_189], %316 {strides = array<i32>} : memref<16x128xf32, #tpu.memory_space<vmem>>, vector<1x128xf32>,
    %c8_i32_190 = arith.constant 8 : i32
    %318 = arith.addi %0, %c8_i32_190 : i32
    %c4_i32_191 = arith.constant 4 : i32
    %319 = arith.muli %318, %c4_i32_191 : i32
    %c1_i32_192 = arith.constant 1 : i32
    %320 = arith.addi %319, %c1_i32_192 : i32
    %321 = arith.index_cast %320 : i32 to index
    %322 = memref.load %arg2[%321] : memref<64xi32, #tpu.memory_space<smem>>
    %323 = arith.index_cast %322 : i32 to index
    %c0_193 = arith.constant 0 : index
    %324 = vector.load %arg4[%323, %c0_193] : memref<64x128xf32, #tpu.memory_space<vmem>>, vector<1x128xf32>
    %c8_194 = arith.constant 8 : index
    %c0_195 = arith.constant 0 : index
    %325 = vector.load %arg6[%c8_194, %c0_195] : memref<16x128xf32, #tpu.memory_space<vmem>>, vector<1x128xf32>
    tpu.vector_store %arg6[%c8_194, %c0_195], %324 {strides = array<i32>} : memref<16x128xf32, #tpu.memory_space<vmem>>, vector<1x128xf32>,
    %c9_i32_196 = arith.constant 9 : i32
    %326 = arith.addi %0, %c9_i32_196 : i32
    %c4_i32_197 = arith.constant 4 : i32
    %327 = arith.muli %326, %c4_i32_197 : i32
    %c1_i32_198 = arith.constant 1 : i32
    %328 = arith.addi %327, %c1_i32_198 : i32
    %329 = arith.index_cast %328 : i32 to index
    %330 = memref.load %arg2[%329] : memref<64xi32, #tpu.memory_space<smem>>
    %331 = arith.index_cast %330 : i32 to index
    %c0_199 = arith.constant 0 : index
    %332 = vector.load %arg4[%331, %c0_199] : memref<64x128xf32, #tpu.memory_space<vmem>>, vector<1x128xf32>
    %c9_200 = arith.constant 9 : index
    %c0_201 = arith.constant 0 : index
    %333 = vector.load %arg6[%c9_200, %c0_201] : memref<16x128xf32, #tpu.memory_space<vmem>>, vector<1x128xf32>
    tpu.vector_store %arg6[%c9_200, %c0_201], %332 {strides = array<i32>} : memref<16x128xf32, #tpu.memory_space<vmem>>, vector<1x128xf32>,
    %c10_i32_202 = arith.constant 10 : i32
    %334 = arith.addi %0, %c10_i32_202 : i32
    %c4_i32_203 = arith.constant 4 : i32
    %335 = arith.muli %334, %c4_i32_203 : i32
    %c1_i32_204 = arith.constant 1 : i32
    %336 = arith.addi %335, %c1_i32_204 : i32
    %337 = arith.index_cast %336 : i32 to index
    %338 = memref.load %arg2[%337] : memref<64xi32, #tpu.memory_space<smem>>
    %339 = arith.index_cast %338 : i32 to index
    %c0_205 = arith.constant 0 : index
    %340 = vector.load %arg4[%339, %c0_205] : memref<64x128xf32, #tpu.memory_space<vmem>>, vector<1x128xf32>
    %c10_206 = arith.constant 10 : index
    %c0_207 = arith.constant 0 : index
    %341 = vector.load %arg6[%c10_206, %c0_207] : memref<16x128xf32, #tpu.memory_space<vmem>>, vector<1x128xf32>
    tpu.vector_store %arg6[%c10_206, %c0_207], %340 {strides = array<i32>} : memref<16x128xf32, #tpu.memory_space<vmem>>, vector<1x128xf32>,
    %c11_i32_208 = arith.constant 11 : i32
    %342 = arith.addi %0, %c11_i32_208 : i32
    %c4_i32_209 = arith.constant 4 : i32
    %343 = arith.muli %342, %c4_i32_209 : i32
    %c1_i32_210 = arith.constant 1 : i32
    %344 = arith.addi %343, %c1_i32_210 : i32
    %345 = arith.index_cast %344 : i32 to index
    %346 = memref.load %arg2[%345] : memref<64xi32, #tpu.memory_space<smem>>
    %347 = arith.index_cast %346 : i32 to index
    %c0_211 = arith.constant 0 : index
    %348 = vector.load %arg4[%347, %c0_211] : memref<64x128xf32, #tpu.memory_space<vmem>>, vector<1x128xf32>
    %c11_212 = arith.constant 11 : index
    %c0_213 = arith.constant 0 : index
    %349 = vector.load %arg6[%c11_212, %c0_213] : memref<16x128xf32, #tpu.memory_space<vmem>>, vector<1x128xf32>
    tpu.vector_store %arg6[%c11_212, %c0_213], %348 {strides = array<i32>} : memref<16x128xf32, #tpu.memory_space<vmem>>, vector<1x128xf32>,
    %c12_i32_214 = arith.constant 12 : i32
    %350 = arith.addi %0, %c12_i32_214 : i32
    %c4_i32_215 = arith.constant 4 : i32
    %351 = arith.muli %350, %c4_i32_215 : i32
    %c1_i32_216 = arith.constant 1 : i32
    %352 = arith.addi %351, %c1_i32_216 : i32
    %353 = arith.index_cast %352 : i32 to index
    %354 = memref.load %arg2[%353] : memref<64xi32, #tpu.memory_space<smem>>
    %355 = arith.index_cast %354 : i32 to index
    %c0_217 = arith.constant 0 : index
    %356 = vector.load %arg4[%355, %c0_217] : memref<64x128xf32, #tpu.memory_space<vmem>>, vector<1x128xf32>
    %c12_218 = arith.constant 12 : index
    %c0_219 = arith.constant 0 : index
    %357 = vector.load %arg6[%c12_218, %c0_219] : memref<16x128xf32, #tpu.memory_space<vmem>>, vector<1x128xf32>
    tpu.vector_store %arg6[%c12_218, %c0_219], %356 {strides = array<i32>} : memref<16x128xf32, #tpu.memory_space<vmem>>, vector<1x128xf32>,
    %c13_i32_220 = arith.constant 13 : i32
    %358 = arith.addi %0, %c13_i32_220 : i32
    %c4_i32_221 = arith.constant 4 : i32
    %359 = arith.muli %358, %c4_i32_221 : i32
    %c1_i32_222 = arith.constant 1 : i32
    %360 = arith.addi %359, %c1_i32_222 : i32
    %361 = arith.index_cast %360 : i32 to index
    %362 = memref.load %arg2[%361] : memref<64xi32, #tpu.memory_space<smem>>
    %363 = arith.index_cast %362 : i32 to index
    %c0_223 = arith.constant 0 : index
    %364 = vector.load %arg4[%363, %c0_223] : memref<64x128xf32, #tpu.memory_space<vmem>>, vector<1x128xf32>
    %c13_224 = arith.constant 13 : index
    %c0_225 = arith.constant 0 : index
    %365 = vector.load %arg6[%c13_224, %c0_225] : memref<16x128xf32, #tpu.memory_space<vmem>>, vector<1x128xf32>
    tpu.vector_store %arg6[%c13_224, %c0_225], %364 {strides = array<i32>} : memref<16x128xf32, #tpu.memory_space<vmem>>, vector<1x128xf32>,
    %c14_i32_226 = arith.constant 14 : i32
    %366 = arith.addi %0, %c14_i32_226 : i32
    %c4_i32_227 = arith.constant 4 : i32
    %367 = arith.muli %366, %c4_i32_227 : i32
    %c1_i32_228 = arith.constant 1 : i32
    %368 = arith.addi %367, %c1_i32_228 : i32
    %369 = arith.index_cast %368 : i32 to index
    %370 = memref.load %arg2[%369] : memref<64xi32, #tpu.memory_space<smem>>
    %371 = arith.index_cast %370 : i32 to index
    %c0_229 = arith.constant 0 : index
    %372 = vector.load %arg4[%371, %c0_229] : memref<64x128xf32, #tpu.memory_space<vmem>>, vector<1x128xf32>
    %c14_230 = arith.constant 14 : index
    %c0_231 = arith.constant 0 : index
    %373 = vector.load %arg6[%c14_230, %c0_231] : memref<16x128xf32, #tpu.memory_space<vmem>>, vector<1x128xf32>
    tpu.vector_store %arg6[%c14_230, %c0_231], %372 {strides = array<i32>} : memref<16x128xf32, #tpu.memory_space<vmem>>, vector<1x128xf32>,
    %c15_i32_232 = arith.constant 15 : i32
    %374 = arith.addi %0, %c15_i32_232 : i32
    %c4_i32_233 = arith.constant 4 : i32
    %375 = arith.muli %374, %c4_i32_233 : i32
    %c1_i32_234 = arith.constant 1 : i32
    %376 = arith.addi %375, %c1_i32_234 : i32
    %377 = arith.index_cast %376 : i32 to index
    %378 = memref.load %arg2[%377] : memref<64xi32, #tpu.memory_space<smem>>
    %379 = arith.index_cast %378 : i32 to index
    %c0_235 = arith.constant 0 : index
    %380 = vector.load %arg4[%379, %c0_235] : memref<64x128xf32, #tpu.memory_space<vmem>>, vector<1x128xf32>
    %c15_236 = arith.constant 15 : index
    %c0_237 = arith.constant 0 : index
    %381 = vector.load %arg6[%c15_236, %c0_237] : memref<16x128xf32, #tpu.memory_space<vmem>>, vector<1x128xf32>
    tpu.vector_store %arg6[%c15_236, %c0_237], %380 {strides = array<i32>} : memref<16x128xf32, #tpu.memory_space<vmem>>, vector<1x128xf32>,
    %c0_238 = arith.constant 0 : index
    %c0_239 = arith.constant 0 : index
    %382 = vector.load %arg6[%c0_238, %c0_239] : memref<16x128xf32, #tpu.memory_space<vmem>>, vector<16x128xf32>
    %c0_240 = arith.constant 0 : index
    %c0_241 = arith.constant 0 : index
    %383 = vector.load %arg3[%c0_240, %c0_241] : memref<16x128xf32, #tpu.memory_space<vmem>>, vector<16x128xf32>
    %384 = arith.mulf %382, %383 : vector<16x128xf32>
    %cst_242 = arith.constant dense<0.000000e+00> : vector<16xf32>
    %385 = vector.multi_reduction <add>, %384, %cst_242 [1] : vector<16x128xf32> to vector<16xf32>
    %386 = vector.shape_cast %385 : vector<16xf32> to vector<16x1xf32>
    %cst_243 = arith.constant 0.000000e+00 : f32
    %387 = vector.broadcast %cst_243 : f32 to vector<16x1xf32>
    %388 = arith.subf %387, %386 : vector<16x1xf32>
    %cst_244 = arith.constant 0.000000e+00 : f32
    %389 = vector.broadcast %cst_244 : f32 to vector<16x1xf32>
    %390 = arith.minimumf %388, %389 : vector<16x1xf32>
    %391 = math.absf %388 : vector<16x1xf32>
    %cst_245 = arith.constant 0.000000e+00 : f32
    %392 = vector.broadcast %cst_245 : f32 to vector<16x1xf32>
    %393 = arith.subf %392, %391 : vector<16x1xf32>
    %394 = math.exp %393 : vector<16x1xf32>
    %395 = math.log1p %394 : vector<16x1xf32>
    %396 = arith.subf %390, %395 : vector<16x1xf32>
    %397 = arith.addf %253, %396 : vector<16x1xf32>
    %c0_i32_246 = arith.constant 0 : i32
    %398 = arith.addi %0, %c0_i32_246 : i32
    %c4_i32_247 = arith.constant 4 : i32
    %399 = arith.muli %398, %c4_i32_247 : i32
    %c2_i32_248 = arith.constant 2 : i32
    %400 = arith.addi %399, %c2_i32_248 : i32
    %401 = arith.index_cast %400 : i32 to index
    %402 = memref.load %arg2[%401] : memref<64xi32, #tpu.memory_space<smem>>
    %403 = arith.index_cast %402 : i32 to index
    %c0_249 = arith.constant 0 : index
    %404 = vector.load %arg4[%403, %c0_249] : memref<64x128xf32, #tpu.memory_space<vmem>>, vector<1x128xf32>
    %c0_250 = arith.constant 0 : index
    %c0_251 = arith.constant 0 : index
    %405 = vector.load %arg6[%c0_250, %c0_251] : memref<16x128xf32, #tpu.memory_space<vmem>>, vector<1x128xf32>
    tpu.vector_store %arg6[%c0_250, %c0_251], %404 {strides = array<i32>} : memref<16x128xf32, #tpu.memory_space<vmem>>, vector<1x128xf32>,
    %c1_i32_252 = arith.constant 1 : i32
    %406 = arith.addi %0, %c1_i32_252 : i32
    %c4_i32_253 = arith.constant 4 : i32
    %407 = arith.muli %406, %c4_i32_253 : i32
    %c2_i32_254 = arith.constant 2 : i32
    %408 = arith.addi %407, %c2_i32_254 : i32
    %409 = arith.index_cast %408 : i32 to index
    %410 = memref.load %arg2[%409] : memref<64xi32, #tpu.memory_space<smem>>
    %411 = arith.index_cast %410 : i32 to index
    %c0_255 = arith.constant 0 : index
    %412 = vector.load %arg4[%411, %c0_255] : memref<64x128xf32, #tpu.memory_space<vmem>>, vector<1x128xf32>
    %c1_256 = arith.constant 1 : index
    %c0_257 = arith.constant 0 : index
    %413 = vector.load %arg6[%c1_256, %c0_257] : memref<16x128xf32, #tpu.memory_space<vmem>>, vector<1x128xf32>
    tpu.vector_store %arg6[%c1_256, %c0_257], %412 {strides = array<i32>} : memref<16x128xf32, #tpu.memory_space<vmem>>, vector<1x128xf32>,
    %c2_i32_258 = arith.constant 2 : i32
    %414 = arith.addi %0, %c2_i32_258 : i32
    %c4_i32_259 = arith.constant 4 : i32
    %415 = arith.muli %414, %c4_i32_259 : i32
    %c2_i32_260 = arith.constant 2 : i32
    %416 = arith.addi %415, %c2_i32_260 : i32
    %417 = arith.index_cast %416 : i32 to index
    %418 = memref.load %arg2[%417] : memref<64xi32, #tpu.memory_space<smem>>
    %419 = arith.index_cast %418 : i32 to index
    %c0_261 = arith.constant 0 : index
    %420 = vector.load %arg4[%419, %c0_261] : memref<64x128xf32, #tpu.memory_space<vmem>>, vector<1x128xf32>
    %c2_262 = arith.constant 2 : index
    %c0_263 = arith.constant 0 : index
    %421 = vector.load %arg6[%c2_262, %c0_263] : memref<16x128xf32, #tpu.memory_space<vmem>>, vector<1x128xf32>
    tpu.vector_store %arg6[%c2_262, %c0_263], %420 {strides = array<i32>} : memref<16x128xf32, #tpu.memory_space<vmem>>, vector<1x128xf32>,
    %c3_i32_264 = arith.constant 3 : i32
    %422 = arith.addi %0, %c3_i32_264 : i32
    %c4_i32_265 = arith.constant 4 : i32
    %423 = arith.muli %422, %c4_i32_265 : i32
    %c2_i32_266 = arith.constant 2 : i32
    %424 = arith.addi %423, %c2_i32_266 : i32
    %425 = arith.index_cast %424 : i32 to index
    %426 = memref.load %arg2[%425] : memref<64xi32, #tpu.memory_space<smem>>
    %427 = arith.index_cast %426 : i32 to index
    %c0_267 = arith.constant 0 : index
    %428 = vector.load %arg4[%427, %c0_267] : memref<64x128xf32, #tpu.memory_space<vmem>>, vector<1x128xf32>
    %c3_268 = arith.constant 3 : index
    %c0_269 = arith.constant 0 : index
    %429 = vector.load %arg6[%c3_268, %c0_269] : memref<16x128xf32, #tpu.memory_space<vmem>>, vector<1x128xf32>
    tpu.vector_store %arg6[%c3_268, %c0_269], %428 {strides = array<i32>} : memref<16x128xf32, #tpu.memory_space<vmem>>, vector<1x128xf32>,
    %c4_i32_270 = arith.constant 4 : i32
    %430 = arith.addi %0, %c4_i32_270 : i32
    %c4_i32_271 = arith.constant 4 : i32
    %431 = arith.muli %430, %c4_i32_271 : i32
    %c2_i32_272 = arith.constant 2 : i32
    %432 = arith.addi %431, %c2_i32_272 : i32
    %433 = arith.index_cast %432 : i32 to index
    %434 = memref.load %arg2[%433] : memref<64xi32, #tpu.memory_space<smem>>
    %435 = arith.index_cast %434 : i32 to index
    %c0_273 = arith.constant 0 : index
    %436 = vector.load %arg4[%435, %c0_273] : memref<64x128xf32, #tpu.memory_space<vmem>>, vector<1x128xf32>
    %c4_274 = arith.constant 4 : index
    %c0_275 = arith.constant 0 : index
    %437 = vector.load %arg6[%c4_274, %c0_275] : memref<16x128xf32, #tpu.memory_space<vmem>>, vector<1x128xf32>
    tpu.vector_store %arg6[%c4_274, %c0_275], %436 {strides = array<i32>} : memref<16x128xf32, #tpu.memory_space<vmem>>, vector<1x128xf32>,
    %c5_i32_276 = arith.constant 5 : i32
    %438 = arith.addi %0, %c5_i32_276 : i32
    %c4_i32_277 = arith.constant 4 : i32
    %439 = arith.muli %438, %c4_i32_277 : i32
    %c2_i32_278 = arith.constant 2 : i32
    %440 = arith.addi %439, %c2_i32_278 : i32
    %441 = arith.index_cast %440 : i32 to index
    %442 = memref.load %arg2[%441] : memref<64xi32, #tpu.memory_space<smem>>
    %443 = arith.index_cast %442 : i32 to index
    %c0_279 = arith.constant 0 : index
    %444 = vector.load %arg4[%443, %c0_279] : memref<64x128xf32, #tpu.memory_space<vmem>>, vector<1x128xf32>
    %c5_280 = arith.constant 5 : index
    %c0_281 = arith.constant 0 : index
    %445 = vector.load %arg6[%c5_280, %c0_281] : memref<16x128xf32, #tpu.memory_space<vmem>>, vector<1x128xf32>
    tpu.vector_store %arg6[%c5_280, %c0_281], %444 {strides = array<i32>} : memref<16x128xf32, #tpu.memory_space<vmem>>, vector<1x128xf32>,
    %c6_i32_282 = arith.constant 6 : i32
    %446 = arith.addi %0, %c6_i32_282 : i32
    %c4_i32_283 = arith.constant 4 : i32
    %447 = arith.muli %446, %c4_i32_283 : i32
    %c2_i32_284 = arith.constant 2 : i32
    %448 = arith.addi %447, %c2_i32_284 : i32
    %449 = arith.index_cast %448 : i32 to index
    %450 = memref.load %arg2[%449] : memref<64xi32, #tpu.memory_space<smem>>
    %451 = arith.index_cast %450 : i32 to index
    %c0_285 = arith.constant 0 : index
    %452 = vector.load %arg4[%451, %c0_285] : memref<64x128xf32, #tpu.memory_space<vmem>>, vector<1x128xf32>
    %c6_286 = arith.constant 6 : index
    %c0_287 = arith.constant 0 : index
    %453 = vector.load %arg6[%c6_286, %c0_287] : memref<16x128xf32, #tpu.memory_space<vmem>>, vector<1x128xf32>
    tpu.vector_store %arg6[%c6_286, %c0_287], %452 {strides = array<i32>} : memref<16x128xf32, #tpu.memory_space<vmem>>, vector<1x128xf32>,
    %c7_i32_288 = arith.constant 7 : i32
    %454 = arith.addi %0, %c7_i32_288 : i32
    %c4_i32_289 = arith.constant 4 : i32
    %455 = arith.muli %454, %c4_i32_289 : i32
    %c2_i32_290 = arith.constant 2 : i32
    %456 = arith.addi %455, %c2_i32_290 : i32
    %457 = arith.index_cast %456 : i32 to index
    %458 = memref.load %arg2[%457] : memref<64xi32, #tpu.memory_space<smem>>
    %459 = arith.index_cast %458 : i32 to index
    %c0_291 = arith.constant 0 : index
    %460 = vector.load %arg4[%459, %c0_291] : memref<64x128xf32, #tpu.memory_space<vmem>>, vector<1x128xf32>
    %c7_292 = arith.constant 7 : index
    %c0_293 = arith.constant 0 : index
    %461 = vector.load %arg6[%c7_292, %c0_293] : memref<16x128xf32, #tpu.memory_space<vmem>>, vector<1x128xf32>
    tpu.vector_store %arg6[%c7_292, %c0_293], %460 {strides = array<i32>} : memref<16x128xf32, #tpu.memory_space<vmem>>, vector<1x128xf32>,
    %c8_i32_294 = arith.constant 8 : i32
    %462 = arith.addi %0, %c8_i32_294 : i32
    %c4_i32_295 = arith.constant 4 : i32
    %463 = arith.muli %462, %c4_i32_295 : i32
    %c2_i32_296 = arith.constant 2 : i32
    %464 = arith.addi %463, %c2_i32_296 : i32
    %465 = arith.index_cast %464 : i32 to index
    %466 = memref.load %arg2[%465] : memref<64xi32, #tpu.memory_space<smem>>
    %467 = arith.index_cast %466 : i32 to index
    %c0_297 = arith.constant 0 : index
    %468 = vector.load %arg4[%467, %c0_297] : memref<64x128xf32, #tpu.memory_space<vmem>>, vector<1x128xf32>
    %c8_298 = arith.constant 8 : index
    %c0_299 = arith.constant 0 : index
    %469 = vector.load %arg6[%c8_298, %c0_299] : memref<16x128xf32, #tpu.memory_space<vmem>>, vector<1x128xf32>
    tpu.vector_store %arg6[%c8_298, %c0_299], %468 {strides = array<i32>} : memref<16x128xf32, #tpu.memory_space<vmem>>, vector<1x128xf32>,
    %c9_i32_300 = arith.constant 9 : i32
    %470 = arith.addi %0, %c9_i32_300 : i32
    %c4_i32_301 = arith.constant 4 : i32
    %471 = arith.muli %470, %c4_i32_301 : i32
    %c2_i32_302 = arith.constant 2 : i32
    %472 = arith.addi %471, %c2_i32_302 : i32
    %473 = arith.index_cast %472 : i32 to index
    %474 = memref.load %arg2[%473] : memref<64xi32, #tpu.memory_space<smem>>
    %475 = arith.index_cast %474 : i32 to index
    %c0_303 = arith.constant 0 : index
    %476 = vector.load %arg4[%475, %c0_303] : memref<64x128xf32, #tpu.memory_space<vmem>>, vector<1x128xf32>
    %c9_304 = arith.constant 9 : index
    %c0_305 = arith.constant 0 : index
    %477 = vector.load %arg6[%c9_304, %c0_305] : memref<16x128xf32, #tpu.memory_space<vmem>>, vector<1x128xf32>
    tpu.vector_store %arg6[%c9_304, %c0_305], %476 {strides = array<i32>} : memref<16x128xf32, #tpu.memory_space<vmem>>, vector<1x128xf32>,
    %c10_i32_306 = arith.constant 10 : i32
    %478 = arith.addi %0, %c10_i32_306 : i32
    %c4_i32_307 = arith.constant 4 : i32
    %479 = arith.muli %478, %c4_i32_307 : i32
    %c2_i32_308 = arith.constant 2 : i32
    %480 = arith.addi %479, %c2_i32_308 : i32
    %481 = arith.index_cast %480 : i32 to index
    %482 = memref.load %arg2[%481] : memref<64xi32, #tpu.memory_space<smem>>
    %483 = arith.index_cast %482 : i32 to index
    %c0_309 = arith.constant 0 : index
    %484 = vector.load %arg4[%483, %c0_309] : memref<64x128xf32, #tpu.memory_space<vmem>>, vector<1x128xf32>
    %c10_310 = arith.constant 10 : index
    %c0_311 = arith.constant 0 : index
    %485 = vector.load %arg6[%c10_310, %c0_311] : memref<16x128xf32, #tpu.memory_space<vmem>>, vector<1x128xf32>
    tpu.vector_store %arg6[%c10_310, %c0_311], %484 {strides = array<i32>} : memref<16x128xf32, #tpu.memory_space<vmem>>, vector<1x128xf32>,
    %c11_i32_312 = arith.constant 11 : i32
    %486 = arith.addi %0, %c11_i32_312 : i32
    %c4_i32_313 = arith.constant 4 : i32
    %487 = arith.muli %486, %c4_i32_313 : i32
    %c2_i32_314 = arith.constant 2 : i32
    %488 = arith.addi %487, %c2_i32_314 : i32
    %489 = arith.index_cast %488 : i32 to index
    %490 = memref.load %arg2[%489] : memref<64xi32, #tpu.memory_space<smem>>
    %491 = arith.index_cast %490 : i32 to index
    %c0_315 = arith.constant 0 : index
    %492 = vector.load %arg4[%491, %c0_315] : memref<64x128xf32, #tpu.memory_space<vmem>>, vector<1x128xf32>
    %c11_316 = arith.constant 11 : index
    %c0_317 = arith.constant 0 : index
    %493 = vector.load %arg6[%c11_316, %c0_317] : memref<16x128xf32, #tpu.memory_space<vmem>>, vector<1x128xf32>
    tpu.vector_store %arg6[%c11_316, %c0_317], %492 {strides = array<i32>} : memref<16x128xf32, #tpu.memory_space<vmem>>, vector<1x128xf32>,
    %c12_i32_318 = arith.constant 12 : i32
    %494 = arith.addi %0, %c12_i32_318 : i32
    %c4_i32_319 = arith.constant 4 : i32
    %495 = arith.muli %494, %c4_i32_319 : i32
    %c2_i32_320 = arith.constant 2 : i32
    %496 = arith.addi %495, %c2_i32_320 : i32
    %497 = arith.index_cast %496 : i32 to index
    %498 = memref.load %arg2[%497] : memref<64xi32, #tpu.memory_space<smem>>
    %499 = arith.index_cast %498 : i32 to index
    %c0_321 = arith.constant 0 : index
    %500 = vector.load %arg4[%499, %c0_321] : memref<64x128xf32, #tpu.memory_space<vmem>>, vector<1x128xf32>
    %c12_322 = arith.constant 12 : index
    %c0_323 = arith.constant 0 : index
    %501 = vector.load %arg6[%c12_322, %c0_323] : memref<16x128xf32, #tpu.memory_space<vmem>>, vector<1x128xf32>
    tpu.vector_store %arg6[%c12_322, %c0_323], %500 {strides = array<i32>} : memref<16x128xf32, #tpu.memory_space<vmem>>, vector<1x128xf32>,
    %c13_i32_324 = arith.constant 13 : i32
    %502 = arith.addi %0, %c13_i32_324 : i32
    %c4_i32_325 = arith.constant 4 : i32
    %503 = arith.muli %502, %c4_i32_325 : i32
    %c2_i32_326 = arith.constant 2 : i32
    %504 = arith.addi %503, %c2_i32_326 : i32
    %505 = arith.index_cast %504 : i32 to index
    %506 = memref.load %arg2[%505] : memref<64xi32, #tpu.memory_space<smem>>
    %507 = arith.index_cast %506 : i32 to index
    %c0_327 = arith.constant 0 : index
    %508 = vector.load %arg4[%507, %c0_327] : memref<64x128xf32, #tpu.memory_space<vmem>>, vector<1x128xf32>
    %c13_328 = arith.constant 13 : index
    %c0_329 = arith.constant 0 : index
    %509 = vector.load %arg6[%c13_328, %c0_329] : memref<16x128xf32, #tpu.memory_space<vmem>>, vector<1x128xf32>
    tpu.vector_store %arg6[%c13_328, %c0_329], %508 {strides = array<i32>} : memref<16x128xf32, #tpu.memory_space<vmem>>, vector<1x128xf32>,
    %c14_i32_330 = arith.constant 14 : i32
    %510 = arith.addi %0, %c14_i32_330 : i32
    %c4_i32_331 = arith.constant 4 : i32
    %511 = arith.muli %510, %c4_i32_331 : i32
    %c2_i32_332 = arith.constant 2 : i32
    %512 = arith.addi %511, %c2_i32_332 : i32
    %513 = arith.index_cast %512 : i32 to index
    %514 = memref.load %arg2[%513] : memref<64xi32, #tpu.memory_space<smem>>
    %515 = arith.index_cast %514 : i32 to index
    %c0_333 = arith.constant 0 : index
    %516 = vector.load %arg4[%515, %c0_333] : memref<64x128xf32, #tpu.memory_space<vmem>>, vector<1x128xf32>
    %c14_334 = arith.constant 14 : index
    %c0_335 = arith.constant 0 : index
    %517 = vector.load %arg6[%c14_334, %c0_335] : memref<16x128xf32, #tpu.memory_space<vmem>>, vector<1x128xf32>
    tpu.vector_store %arg6[%c14_334, %c0_335], %516 {strides = array<i32>} : memref<16x128xf32, #tpu.memory_space<vmem>>, vector<1x128xf32>,
    %c15_i32_336 = arith.constant 15 : i32
    %518 = arith.addi %0, %c15_i32_336 : i32
    %c4_i32_337 = arith.constant 4 : i32
    %519 = arith.muli %518, %c4_i32_337 : i32
    %c2_i32_338 = arith.constant 2 : i32
    %520 = arith.addi %519, %c2_i32_338 : i32
    %521 = arith.index_cast %520 : i32 to index
    %522 = memref.load %arg2[%521] : memref<64xi32, #tpu.memory_space<smem>>
    %523 = arith.index_cast %522 : i32 to index
    %c0_339 = arith.constant 0 : index
    %524 = vector.load %arg4[%523, %c0_339] : memref<64x128xf32, #tpu.memory_space<vmem>>, vector<1x128xf32>
    %c15_340 = arith.constant 15 : index
    %c0_341 = arith.constant 0 : index
    %525 = vector.load %arg6[%c15_340, %c0_341] : memref<16x128xf32, #tpu.memory_space<vmem>>, vector<1x128xf32>
    tpu.vector_store %arg6[%c15_340, %c0_341], %524 {strides = array<i32>} : memref<16x128xf32, #tpu.memory_space<vmem>>, vector<1x128xf32>,
    %c0_342 = arith.constant 0 : index
    %c0_343 = arith.constant 0 : index
    %526 = vector.load %arg6[%c0_342, %c0_343] : memref<16x128xf32, #tpu.memory_space<vmem>>, vector<16x128xf32>
    %c0_344 = arith.constant 0 : index
    %c0_345 = arith.constant 0 : index
    %527 = vector.load %arg3[%c0_344, %c0_345] : memref<16x128xf32, #tpu.memory_space<vmem>>, vector<16x128xf32>
    %528 = arith.mulf %526, %527 : vector<16x128xf32>
    %cst_346 = arith.constant dense<0.000000e+00> : vector<16xf32>
    %529 = vector.multi_reduction <add>, %528, %cst_346 [1] : vector<16x128xf32> to vector<16xf32>
    %530 = vector.shape_cast %529 : vector<16xf32> to vector<16x1xf32>
    %cst_347 = arith.constant 0.000000e+00 : f32
    %531 = vector.broadcast %cst_347 : f32 to vector<16x1xf32>
    %532 = arith.subf %531, %530 : vector<16x1xf32>
    %cst_348 = arith.constant 0.000000e+00 : f32
    %533 = vector.broadcast %cst_348 : f32 to vector<16x1xf32>
    %534 = arith.minimumf %532, %533 : vector<16x1xf32>
    %535 = math.absf %532 : vector<16x1xf32>
    %cst_349 = arith.constant 0.000000e+00 : f32
    %536 = vector.broadcast %cst_349 : f32 to vector<16x1xf32>
    %537 = arith.subf %536, %535 : vector<16x1xf32>
    %538 = math.exp %537 : vector<16x1xf32>
    %539 = math.log1p %538 : vector<16x1xf32>
    %540 = arith.subf %534, %539 : vector<16x1xf32>
    %541 = arith.addf %397, %540 : vector<16x1xf32>
    %c0_i32_350 = arith.constant 0 : i32
    %542 = arith.addi %0, %c0_i32_350 : i32
    %c4_i32_351 = arith.constant 4 : i32
    %543 = arith.muli %542, %c4_i32_351 : i32
    %c3_i32_352 = arith.constant 3 : i32
    %544 = arith.addi %543, %c3_i32_352 : i32
    %545 = arith.index_cast %544 : i32 to index
    %546 = memref.load %arg2[%545] : memref<64xi32, #tpu.memory_space<smem>>
    %547 = arith.index_cast %546 : i32 to index
    %c0_353 = arith.constant 0 : index
    %548 = vector.load %arg4[%547, %c0_353] : memref<64x128xf32, #tpu.memory_space<vmem>>, vector<1x128xf32>
    %c0_354 = arith.constant 0 : index
    %c0_355 = arith.constant 0 : index
    %549 = vector.load %arg6[%c0_354, %c0_355] : memref<16x128xf32, #tpu.memory_space<vmem>>, vector<1x128xf32>
    tpu.vector_store %arg6[%c0_354, %c0_355], %548 {strides = array<i32>} : memref<16x128xf32, #tpu.memory_space<vmem>>, vector<1x128xf32>,
    %c1_i32_356 = arith.constant 1 : i32
    %550 = arith.addi %0, %c1_i32_356 : i32
    %c4_i32_357 = arith.constant 4 : i32
    %551 = arith.muli %550, %c4_i32_357 : i32
    %c3_i32_358 = arith.constant 3 : i32
    %552 = arith.addi %551, %c3_i32_358 : i32
    %553 = arith.index_cast %552 : i32 to index
    %554 = memref.load %arg2[%553] : memref<64xi32, #tpu.memory_space<smem>>
    %555 = arith.index_cast %554 : i32 to index
    %c0_359 = arith.constant 0 : index
    %556 = vector.load %arg4[%555, %c0_359] : memref<64x128xf32, #tpu.memory_space<vmem>>, vector<1x128xf32>
    %c1_360 = arith.constant 1 : index
    %c0_361 = arith.constant 0 : index
    %557 = vector.load %arg6[%c1_360, %c0_361] : memref<16x128xf32, #tpu.memory_space<vmem>>, vector<1x128xf32>
    tpu.vector_store %arg6[%c1_360, %c0_361], %556 {strides = array<i32>} : memref<16x128xf32, #tpu.memory_space<vmem>>, vector<1x128xf32>,
    %c2_i32_362 = arith.constant 2 : i32
    %558 = arith.addi %0, %c2_i32_362 : i32
    %c4_i32_363 = arith.constant 4 : i32
    %559 = arith.muli %558, %c4_i32_363 : i32
    %c3_i32_364 = arith.constant 3 : i32
    %560 = arith.addi %559, %c3_i32_364 : i32
    %561 = arith.index_cast %560 : i32 to index
    %562 = memref.load %arg2[%561] : memref<64xi32, #tpu.memory_space<smem>>
    %563 = arith.index_cast %562 : i32 to index
    %c0_365 = arith.constant 0 : index
    %564 = vector.load %arg4[%563, %c0_365] : memref<64x128xf32, #tpu.memory_space<vmem>>, vector<1x128xf32>
    %c2_366 = arith.constant 2 : index
    %c0_367 = arith.constant 0 : index
    %565 = vector.load %arg6[%c2_366, %c0_367] : memref<16x128xf32, #tpu.memory_space<vmem>>, vector<1x128xf32>
    tpu.vector_store %arg6[%c2_366, %c0_367], %564 {strides = array<i32>} : memref<16x128xf32, #tpu.memory_space<vmem>>, vector<1x128xf32>,
    %c3_i32_368 = arith.constant 3 : i32
    %566 = arith.addi %0, %c3_i32_368 : i32
    %c4_i32_369 = arith.constant 4 : i32
    %567 = arith.muli %566, %c4_i32_369 : i32
    %c3_i32_370 = arith.constant 3 : i32
    %568 = arith.addi %567, %c3_i32_370 : i32
    %569 = arith.index_cast %568 : i32 to index
    %570 = memref.load %arg2[%569] : memref<64xi32, #tpu.memory_space<smem>>
    %571 = arith.index_cast %570 : i32 to index
    %c0_371 = arith.constant 0 : index
    %572 = vector.load %arg4[%571, %c0_371] : memref<64x128xf32, #tpu.memory_space<vmem>>, vector<1x128xf32>
    %c3_372 = arith.constant 3 : index
    %c0_373 = arith.constant 0 : index
    %573 = vector.load %arg6[%c3_372, %c0_373] : memref<16x128xf32, #tpu.memory_space<vmem>>, vector<1x128xf32>
    tpu.vector_store %arg6[%c3_372, %c0_373], %572 {strides = array<i32>} : memref<16x128xf32, #tpu.memory_space<vmem>>, vector<1x128xf32>,
    %c4_i32_374 = arith.constant 4 : i32
    %574 = arith.addi %0, %c4_i32_374 : i32
    %c4_i32_375 = arith.constant 4 : i32
    %575 = arith.muli %574, %c4_i32_375 : i32
    %c3_i32_376 = arith.constant 3 : i32
    %576 = arith.addi %575, %c3_i32_376 : i32
    %577 = arith.index_cast %576 : i32 to index
    %578 = memref.load %arg2[%577] : memref<64xi32, #tpu.memory_space<smem>>
    %579 = arith.index_cast %578 : i32 to index
    %c0_377 = arith.constant 0 : index
    %580 = vector.load %arg4[%579, %c0_377] : memref<64x128xf32, #tpu.memory_space<vmem>>, vector<1x128xf32>
    %c4_378 = arith.constant 4 : index
    %c0_379 = arith.constant 0 : index
    %581 = vector.load %arg6[%c4_378, %c0_379] : memref<16x128xf32, #tpu.memory_space<vmem>>, vector<1x128xf32>
    tpu.vector_store %arg6[%c4_378, %c0_379], %580 {strides = array<i32>} : memref<16x128xf32, #tpu.memory_space<vmem>>, vector<1x128xf32>,
    %c5_i32_380 = arith.constant 5 : i32
    %582 = arith.addi %0, %c5_i32_380 : i32
    %c4_i32_381 = arith.constant 4 : i32
    %583 = arith.muli %582, %c4_i32_381 : i32
    %c3_i32_382 = arith.constant 3 : i32
    %584 = arith.addi %583, %c3_i32_382 : i32
    %585 = arith.index_cast %584 : i32 to index
    %586 = memref.load %arg2[%585] : memref<64xi32, #tpu.memory_space<smem>>
    %587 = arith.index_cast %586 : i32 to index
    %c0_383 = arith.constant 0 : index
    %588 = vector.load %arg4[%587, %c0_383] : memref<64x128xf32, #tpu.memory_space<vmem>>, vector<1x128xf32>
    %c5_384 = arith.constant 5 : index
    %c0_385 = arith.constant 0 : index
    %589 = vector.load %arg6[%c5_384, %c0_385] : memref<16x128xf32, #tpu.memory_space<vmem>>, vector<1x128xf32>
    tpu.vector_store %arg6[%c5_384, %c0_385], %588 {strides = array<i32>} : memref<16x128xf32, #tpu.memory_space<vmem>>, vector<1x128xf32>,
    %c6_i32_386 = arith.constant 6 : i32
    %590 = arith.addi %0, %c6_i32_386 : i32
    %c4_i32_387 = arith.constant 4 : i32
    %591 = arith.muli %590, %c4_i32_387 : i32
    %c3_i32_388 = arith.constant 3 : i32
    %592 = arith.addi %591, %c3_i32_388 : i32
    %593 = arith.index_cast %592 : i32 to index
    %594 = memref.load %arg2[%593] : memref<64xi32, #tpu.memory_space<smem>>
    %595 = arith.index_cast %594 : i32 to index
    %c0_389 = arith.constant 0 : index
    %596 = vector.load %arg4[%595, %c0_389] : memref<64x128xf32, #tpu.memory_space<vmem>>, vector<1x128xf32>
    %c6_390 = arith.constant 6 : index
    %c0_391 = arith.constant 0 : index
    %597 = vector.load %arg6[%c6_390, %c0_391] : memref<16x128xf32, #tpu.memory_space<vmem>>, vector<1x128xf32>
    tpu.vector_store %arg6[%c6_390, %c0_391], %596 {strides = array<i32>} : memref<16x128xf32, #tpu.memory_space<vmem>>, vector<1x128xf32>,
    %c7_i32_392 = arith.constant 7 : i32
    %598 = arith.addi %0, %c7_i32_392 : i32
    %c4_i32_393 = arith.constant 4 : i32
    %599 = arith.muli %598, %c4_i32_393 : i32
    %c3_i32_394 = arith.constant 3 : i32
    %600 = arith.addi %599, %c3_i32_394 : i32
    %601 = arith.index_cast %600 : i32 to index
    %602 = memref.load %arg2[%601] : memref<64xi32, #tpu.memory_space<smem>>
    %603 = arith.index_cast %602 : i32 to index
    %c0_395 = arith.constant 0 : index
    %604 = vector.load %arg4[%603, %c0_395] : memref<64x128xf32, #tpu.memory_space<vmem>>, vector<1x128xf32>
    %c7_396 = arith.constant 7 : index
    %c0_397 = arith.constant 0 : index
    %605 = vector.load %arg6[%c7_396, %c0_397] : memref<16x128xf32, #tpu.memory_space<vmem>>, vector<1x128xf32>
    tpu.vector_store %arg6[%c7_396, %c0_397], %604 {strides = array<i32>} : memref<16x128xf32, #tpu.memory_space<vmem>>, vector<1x128xf32>,
    %c8_i32_398 = arith.constant 8 : i32
    %606 = arith.addi %0, %c8_i32_398 : i32
    %c4_i32_399 = arith.constant 4 : i32
    %607 = arith.muli %606, %c4_i32_399 : i32
    %c3_i32_400 = arith.constant 3 : i32
    %608 = arith.addi %607, %c3_i32_400 : i32
    %609 = arith.index_cast %608 : i32 to index
    %610 = memref.load %arg2[%609] : memref<64xi32, #tpu.memory_space<smem>>
    %611 = arith.index_cast %610 : i32 to index
    %c0_401 = arith.constant 0 : index
    %612 = vector.load %arg4[%611, %c0_401] : memref<64x128xf32, #tpu.memory_space<vmem>>, vector<1x128xf32>
    %c8_402 = arith.constant 8 : index
    %c0_403 = arith.constant 0 : index
    %613 = vector.load %arg6[%c8_402, %c0_403] : memref<16x128xf32, #tpu.memory_space<vmem>>, vector<1x128xf32>
    tpu.vector_store %arg6[%c8_402, %c0_403], %612 {strides = array<i32>} : memref<16x128xf32, #tpu.memory_space<vmem>>, vector<1x128xf32>,
    %c9_i32_404 = arith.constant 9 : i32
    %614 = arith.addi %0, %c9_i32_404 : i32
    %c4_i32_405 = arith.constant 4 : i32
    %615 = arith.muli %614, %c4_i32_405 : i32
    %c3_i32_406 = arith.constant 3 : i32
    %616 = arith.addi %615, %c3_i32_406 : i32
    %617 = arith.index_cast %616 : i32 to index
    %618 = memref.load %arg2[%617] : memref<64xi32, #tpu.memory_space<smem>>
    %619 = arith.index_cast %618 : i32 to index
    %c0_407 = arith.constant 0 : index
    %620 = vector.load %arg4[%619, %c0_407] : memref<64x128xf32, #tpu.memory_space<vmem>>, vector<1x128xf32>
    %c9_408 = arith.constant 9 : index
    %c0_409 = arith.constant 0 : index
    %621 = vector.load %arg6[%c9_408, %c0_409] : memref<16x128xf32, #tpu.memory_space<vmem>>, vector<1x128xf32>
    tpu.vector_store %arg6[%c9_408, %c0_409], %620 {strides = array<i32>} : memref<16x128xf32, #tpu.memory_space<vmem>>, vector<1x128xf32>,
    %c10_i32_410 = arith.constant 10 : i32
    %622 = arith.addi %0, %c10_i32_410 : i32
    %c4_i32_411 = arith.constant 4 : i32
    %623 = arith.muli %622, %c4_i32_411 : i32
    %c3_i32_412 = arith.constant 3 : i32
    %624 = arith.addi %623, %c3_i32_412 : i32
    %625 = arith.index_cast %624 : i32 to index
    %626 = memref.load %arg2[%625] : memref<64xi32, #tpu.memory_space<smem>>
    %627 = arith.index_cast %626 : i32 to index
    %c0_413 = arith.constant 0 : index
    %628 = vector.load %arg4[%627, %c0_413] : memref<64x128xf32, #tpu.memory_space<vmem>>, vector<1x128xf32>
    %c10_414 = arith.constant 10 : index
    %c0_415 = arith.constant 0 : index
    %629 = vector.load %arg6[%c10_414, %c0_415] : memref<16x128xf32, #tpu.memory_space<vmem>>, vector<1x128xf32>
    tpu.vector_store %arg6[%c10_414, %c0_415], %628 {strides = array<i32>} : memref<16x128xf32, #tpu.memory_space<vmem>>, vector<1x128xf32>,
    %c11_i32_416 = arith.constant 11 : i32
    %630 = arith.addi %0, %c11_i32_416 : i32
    %c4_i32_417 = arith.constant 4 : i32
    %631 = arith.muli %630, %c4_i32_417 : i32
    %c3_i32_418 = arith.constant 3 : i32
    %632 = arith.addi %631, %c3_i32_418 : i32
    %633 = arith.index_cast %632 : i32 to index
    %634 = memref.load %arg2[%633] : memref<64xi32, #tpu.memory_space<smem>>
    %635 = arith.index_cast %634 : i32 to index
    %c0_419 = arith.constant 0 : index
    %636 = vector.load %arg4[%635, %c0_419] : memref<64x128xf32, #tpu.memory_space<vmem>>, vector<1x128xf32>
    %c11_420 = arith.constant 11 : index
    %c0_421 = arith.constant 0 : index
    %637 = vector.load %arg6[%c11_420, %c0_421] : memref<16x128xf32, #tpu.memory_space<vmem>>, vector<1x128xf32>
    tpu.vector_store %arg6[%c11_420, %c0_421], %636 {strides = array<i32>} : memref<16x128xf32, #tpu.memory_space<vmem>>, vector<1x128xf32>,
    %c12_i32_422 = arith.constant 12 : i32
    %638 = arith.addi %0, %c12_i32_422 : i32
    %c4_i32_423 = arith.constant 4 : i32
    %639 = arith.muli %638, %c4_i32_423 : i32
    %c3_i32_424 = arith.constant 3 : i32
    %640 = arith.addi %639, %c3_i32_424 : i32
    %641 = arith.index_cast %640 : i32 to index
    %642 = memref.load %arg2[%641] : memref<64xi32, #tpu.memory_space<smem>>
    %643 = arith.index_cast %642 : i32 to index
    %c0_425 = arith.constant 0 : index
    %644 = vector.load %arg4[%643, %c0_425] : memref<64x128xf32, #tpu.memory_space<vmem>>, vector<1x128xf32>
    %c12_426 = arith.constant 12 : index
    %c0_427 = arith.constant 0 : index
    %645 = vector.load %arg6[%c12_426, %c0_427] : memref<16x128xf32, #tpu.memory_space<vmem>>, vector<1x128xf32>
    tpu.vector_store %arg6[%c12_426, %c0_427], %644 {strides = array<i32>} : memref<16x128xf32, #tpu.memory_space<vmem>>, vector<1x128xf32>,
    %c13_i32_428 = arith.constant 13 : i32
    %646 = arith.addi %0, %c13_i32_428 : i32
    %c4_i32_429 = arith.constant 4 : i32
    %647 = arith.muli %646, %c4_i32_429 : i32
    %c3_i32_430 = arith.constant 3 : i32
    %648 = arith.addi %647, %c3_i32_430 : i32
    %649 = arith.index_cast %648 : i32 to index
    %650 = memref.load %arg2[%649] : memref<64xi32, #tpu.memory_space<smem>>
    %651 = arith.index_cast %650 : i32 to index
    %c0_431 = arith.constant 0 : index
    %652 = vector.load %arg4[%651, %c0_431] : memref<64x128xf32, #tpu.memory_space<vmem>>, vector<1x128xf32>
    %c13_432 = arith.constant 13 : index
    %c0_433 = arith.constant 0 : index
    %653 = vector.load %arg6[%c13_432, %c0_433] : memref<16x128xf32, #tpu.memory_space<vmem>>, vector<1x128xf32>
    tpu.vector_store %arg6[%c13_432, %c0_433], %652 {strides = array<i32>} : memref<16x128xf32, #tpu.memory_space<vmem>>, vector<1x128xf32>,
    %c14_i32_434 = arith.constant 14 : i32
    %654 = arith.addi %0, %c14_i32_434 : i32
    %c4_i32_435 = arith.constant 4 : i32
    %655 = arith.muli %654, %c4_i32_435 : i32
    %c3_i32_436 = arith.constant 3 : i32
    %656 = arith.addi %655, %c3_i32_436 : i32
    %657 = arith.index_cast %656 : i32 to index
    %658 = memref.load %arg2[%657] : memref<64xi32, #tpu.memory_space<smem>>
    %659 = arith.index_cast %658 : i32 to index
    %c0_437 = arith.constant 0 : index
    %660 = vector.load %arg4[%659, %c0_437] : memref<64x128xf32, #tpu.memory_space<vmem>>, vector<1x128xf32>
    %c14_438 = arith.constant 14 : index
    %c0_439 = arith.constant 0 : index
    %661 = vector.load %arg6[%c14_438, %c0_439] : memref<16x128xf32, #tpu.memory_space<vmem>>, vector<1x128xf32>
    tpu.vector_store %arg6[%c14_438, %c0_439], %660 {strides = array<i32>} : memref<16x128xf32, #tpu.memory_space<vmem>>, vector<1x128xf32>,
    %c15_i32_440 = arith.constant 15 : i32
    %662 = arith.addi %0, %c15_i32_440 : i32
    %c4_i32_441 = arith.constant 4 : i32
    %663 = arith.muli %662, %c4_i32_441 : i32
    %c3_i32_442 = arith.constant 3 : i32
    %664 = arith.addi %663, %c3_i32_442 : i32
    %665 = arith.index_cast %664 : i32 to index
    %666 = memref.load %arg2[%665] : memref<64xi32, #tpu.memory_space<smem>>
    %667 = arith.index_cast %666 : i32 to index
    %c0_443 = arith.constant 0 : index
    %668 = vector.load %arg4[%667, %c0_443] : memref<64x128xf32, #tpu.memory_space<vmem>>, vector<1x128xf32>
    %c15_444 = arith.constant 15 : index
    %c0_445 = arith.constant 0 : index
    %669 = vector.load %arg6[%c15_444, %c0_445] : memref<16x128xf32, #tpu.memory_space<vmem>>, vector<1x128xf32>
    tpu.vector_store %arg6[%c15_444, %c0_445], %668 {strides = array<i32>} : memref<16x128xf32, #tpu.memory_space<vmem>>, vector<1x128xf32>,
    %c0_446 = arith.constant 0 : index
    %c0_447 = arith.constant 0 : index
    %670 = vector.load %arg6[%c0_446, %c0_447] : memref<16x128xf32, #tpu.memory_space<vmem>>, vector<16x128xf32>
    %c0_448 = arith.constant 0 : index
    %c0_449 = arith.constant 0 : index
    %671 = vector.load %arg3[%c0_448, %c0_449] : memref<16x128xf32, #tpu.memory_space<vmem>>, vector<16x128xf32>
    %672 = arith.mulf %670, %671 : vector<16x128xf32>
    %cst_450 = arith.constant dense<0.000000e+00> : vector<16xf32>
    %673 = vector.multi_reduction <add>, %672, %cst_450 [1] : vector<16x128xf32> to vector<16xf32>
    %674 = vector.shape_cast %673 : vector<16xf32> to vector<16x1xf32>
    %cst_451 = arith.constant 0.000000e+00 : f32
    %675 = vector.broadcast %cst_451 : f32 to vector<16x1xf32>
    %676 = arith.subf %675, %674 : vector<16x1xf32>
    %cst_452 = arith.constant 0.000000e+00 : f32
    %677 = vector.broadcast %cst_452 : f32 to vector<16x1xf32>
    %678 = arith.minimumf %676, %677 : vector<16x1xf32>
    %679 = math.absf %676 : vector<16x1xf32>
    %cst_453 = arith.constant 0.000000e+00 : f32
    %680 = vector.broadcast %cst_453 : f32 to vector<16x1xf32>
    %681 = arith.subf %680, %679 : vector<16x1xf32>
    %682 = math.exp %681 : vector<16x1xf32>
    %683 = math.log1p %682 : vector<16x1xf32>
    %684 = arith.subf %678, %683 : vector<16x1xf32>
    %685 = arith.addf %541, %684 : vector<16x1xf32>
    %686 = tpu.iota {dimensions = array<i32: 0>} : vector<16x1xi32>
    %687 = vector.broadcast %0 : i32 to vector<16x1xi32>
    %688 = arith.addi %687, %686 : vector<16x1xi32>
    %c16_i32_454 = arith.constant 16 : i32
    %689 = vector.broadcast %c16_i32_454 : i32 to vector<16x1xi32>
    %690 = arith.cmpi slt, %688, %689 : vector<16x1xi32>
    %cst_455 = arith.constant 0.000000e+00 : f32
    %691 = vector.broadcast %cst_455 : f32 to vector<16x1xf32>
    %692 = arith.select %690, %685, %691 : vector<16x1xi1>, vector<16x1xf32>
    %693 = vector.shape_cast %692 : vector<16x1xf32> to vector<1x16x1xf32>
    %cst_456 = arith.constant dense<0.000000e+00> : vector<1xf32>
    %694 = vector.multi_reduction <add>, %693, %cst_456 [1, 2] : vector<1x16x1xf32> to vector<1xf32>
    %695 = vector.shape_cast %694 : vector<1xf32> to vector<1x1x1xf32>
    %696 = vector.extract %695[0, 0, 0] : f32 from vector<1x1x1xf32>
    %cst_457 = arith.constant 0.000000e+00 : f32
    %697 = arith.subf %cst_457, %696 : f32
    %698 = vector.broadcast %697 : f32 to vector<1x8x128xf32>
    %c0_458 = arith.constant 0 : index
    %c0_459 = arith.constant 0 : index
    %c0_460 = arith.constant 0 : index
    %699 = vector.load %arg5[%c0_458, %c0_459, %c0_460] : memref<1x8x128xf32, #tpu.memory_space<vmem>>, vector<1x8x128xf32>
    tpu.vector_store %arg5[%c0_458, %c0_459, %c0_460], %698 {strides = array<i32>} : memref<1x8x128xf32, #tpu.memory_space<vmem>>, vector<1x8x128xf32>,
    return
  }
  func.func @transform_0(%arg0: i32, %arg1: memref<16xi32, #tpu.memory_space<smem>>, %arg2: memref<64xi32, #tpu.memory_space<smem>>) -> (i32, i32) {
    %c0_i32 = arith.constant 0 : i32
    %c0_i32_0 = arith.constant 0 : i32
    return %arg0, %c0_i32 : i32, i32
  }
  func.func @transform_1(%arg0: i32, %arg1: memref<16xi32, #tpu.memory_space<smem>>, %arg2: memref<64xi32, #tpu.memory_space<smem>>) -> (i32, i32) {
    %c0_i32 = arith.constant 0 : i32
    %c0_i32_0 = arith.constant 0 : i32
    %c0_i32_1 = arith.constant 0 : i32
    return %c0_i32, %c0_i32_0 : i32, i32
  }
  func.func @transform_2(%arg0: i32, %arg1: memref<16xi32, #tpu.memory_space<smem>>, %arg2: memref<64xi32, #tpu.memory_space<smem>>) -> (i32, i32, i32) {
    %c0_i32 = arith.constant 0 : i32
    %c0_i32_0 = arith.constant 0 : i32
    %c0_i32_1 = arith.constant 0 : i32
    return %arg0, %c0_i32, %c0_i32_0 : i32, i32, i32
  }
}

</mosaic_0001>

<llo_original>
// kernel: tpu_custom_call.1
$region0: #{tpu_custom_call.1}
  #allocation0 [shape = 'u32[]', space=smem, size = 0x4, offset = 0x4, fixed_abs, tag = 'smem constant byte address 0x4 - core index']
  #allocation1 [shape = 'u32[72,128]{1,0:T(1,128)}', space=vmem, size = 0x9000, scoped, tag = 'internal scratch']
  #allocation2 [shape = 'f32[16,128]{1,0:T(8,128)}', space=vmem, size = 0x2000, scoped, tag = 'scratch operand']
  #allocation3 [shape = 's32[1]{0}', space=sflag, size = 0x4, scoped, tag = 'scoped memory for tpu_custom_call.1']
  #allocation4 [shape = 'u8[512]{0}', space=smem, size = 0x200, scoped, tag = 'prefetched SMEM operand 0']
  #allocation5 [shape = 'u8[512]{0}', space=smem, size = 0x200, scoped, tag = 'prefetched SMEM operand 1']
  %s0 = inlined_call_operand.hbm [shape: s32[16], index: 0, kind: input, shape index: {}]
  %s1 = inlined_call_operand.hbm [shape: s32[64], index: 1, kind: input, shape index: {}]
  %s2 = inlined_call_operand.hbm [shape: f32[16,128], index: 2, kind: input, shape index: {}]
  %s3 = inlined_call_operand.hbm [shape: f32[64,128], index: 3, kind: input, shape index: {}]
  %s4 = inlined_call_operand.hbm [shape: f32[1,8,128], index: 4, kind: output, shape index: {}]
  %s5 = sld [smem:[#allocation0]]
  $region26: #{tpu_custom_call.1} parent=0
    _
  %s7 = ssub.s32 1, %s5
  %s8 = scalar_select 0, %s7, %s5
  %s10 = sshll.u32 %s0, 4
  %s11 = int_to_ptr.hbm [resolvable:$true] %s10
  %13 = dma.hbm_to_smem %s11, 16, [#allocation4], [#allocation3]
  %s15 = sshll.u32 %s1, 4
  %s16 = int_to_ptr.hbm [resolvable:$true] %s15
  %18 = dma.hbm_to_smem %s16, 16, [#allocation5], [#allocation3]
  %20 = dma.done [#allocation3], 32
  %21 = sfence
  $region1: #{tpu_custom_call.1} parent=0
    #allocation6 [shape = 'u8[8192]{0}', space=vmem, size = 0x2000, scoped, tag = 'input window, operand 2, single buffered']
    #allocation7 [shape = 's32[1]{0}', space=sflag, size = 0x4, scoped, tag = 'scoped memory for tpu_custom_call.1']
    #allocation8 [shape = 's32[1]{0}', space=sflag, size = 0x4, scoped, tag = 'scoped memory for tpu_custom_call.1']
    #allocation9 [shape = 'u8[32768]{0}', space=vmem, size = 0x8000, scoped, tag = 'input window, operand 3, single buffered']
    #allocation10 [shape = 's32[1]{0}', space=sflag, size = 0x4, scoped, tag = 'scoped memory for tpu_custom_call.1']
    #allocation11 [shape = 'u8[4096]{0}', space=vmem, size = 0x1000, scoped, tag = 'output window, operand 0, single buffered']
    %22 = vsyncpa [#allocation7], 0
    %23 = vsyncpa [#allocation10], 0
    %24 = vsyncpa [#allocation8], 0
    // Predicated region
    $region2: #{tpu_custom_call.1} parent=1 // pred_check
      _
    $region3: #{tpu_custom_call.1} parent=1 // pred_check_branch
      %26 = sbr.rel (0) target = $region5
    $region4: #{tpu_custom_call.1} parent=1 // pred_region
      %28 = vsyncadd [#allocation7], 0
      %s29 = sshll.u32 %s2, 4
      %s30 = int_to_ptr.hbm [resolvable:$true] %s29
      %s31 = sshll.u32 [#allocation6], 4
      %s32 = int_to_ptr.vmem [resolvable:$true] %s31
      %37 = dma.hbm_to_vmem [thread:$0]  %s30, 256, %s32, [#allocation7], 128, 128, 8
    $region5: #{tpu_custom_call.1} parent=1 // pred_fallthru
      _
    // Predicated region
    $region6: #{tpu_custom_call.1} parent=1 // pred_check
      _
    $region7: #{tpu_custom_call.1} parent=1 // pred_check_branch
      %39 = sbr.rel (0) target = $region9
    $region8: #{tpu_custom_call.1} parent=1 // pred_region
      %41 = vsyncadd [#allocation10], 0
      %s42 = sshll.u32 %s3, 4
      %s43 = int_to_ptr.hbm [resolvable:$true] %s42
      %s44 = sshll.u32 [#allocation9], 4
      %s45 = int_to_ptr.vmem [resolvable:$true] %s44
      %50 = dma.hbm_to_vmem [thread:$0]  %s43, 1024, %s45, [#allocation10], 128, 128, 8
    $region9: #{tpu_custom_call.1} parent=1 // pred_fallthru
      _
    // Predicated region
    $region10: #{tpu_custom_call.1} parent=1 // pred_check
      _
    $region11: #{tpu_custom_call.1} parent=1 // pred_check_branch
      %52 = sbr.rel (0) target = $region13
    $region12: #{tpu_custom_call.1} parent=1 // pred_region
      %54 = dma.done [#allocation7], 256
    $region13: #{tpu_custom_call.1} parent=1 // pred_fallthru
      _
    // Predicated region
    $region14: #{tpu_custom_call.1} parent=1 // pred_check
      _
    $region15: #{tpu_custom_call.1} parent=1 // pred_check_branch
      %56 = sbr.rel (0) target = $region17
    $region16: #{tpu_custom_call.1} parent=1 // pred_region
      %58 = dma.done [#allocation10], 1024
    $region17: #{tpu_custom_call.1} parent=1 // pred_fallthru
      _
    %s59 = smul.u32 0, 16
    %s60 = sld [smem:[#allocation4 + %s59]]
    %s61 = scalar_lea.vmem [#allocation9], %s60
    %v62 = vld [vmem:[%s61] sm:$0x1]
    %63 = vst [vmem:[#allocation2] sm:$0x1] %v62
    %s64 = sadd.s32 %s59, 1
    %s65 = sld [smem:[#allocation4 + %s64]]
    %s66 = scalar_lea.vmem [#allocation9], %s65
    %v67 = vld [vmem:[%s66] sm:$0x1]
    %68 = vst [vmem:[#allocation2 + $0x1] sm:$0x1] %v67
    %s69 = sadd.s32 %s59, 2
    %s70 = sld [smem:[#allocation4 + %s69]]
    %s71 = scalar_lea.vmem [#allocation9], %s70
    %v72 = vld [vmem:[%s71] sm:$0x1]
    %73 = vst [vmem:[#allocation2 + $0x2] sm:$0x1] %v72
    %s74 = sadd.s32 %s59, 3
    %s75 = sld [smem:[#allocation4 + %s74]]
    %s76 = scalar_lea.vmem [#allocation9], %s75
    %v77 = vld [vmem:[%s76] sm:$0x1]
    %78 = vst [vmem:[#allocation2 + $0x3] sm:$0x1] %v77
    %s79 = sadd.s32 %s59, 4
    %s80 = sld [smem:[#allocation4 + %s79]]
    %s81 = scalar_lea.vmem [#allocation9], %s80
    %v82 = vld [vmem:[%s81] sm:$0x1]
    %83 = vst [vmem:[#allocation2 + $0x4] sm:$0x1] %v82
    %s84 = sadd.s32 %s59, 5
    %s85 = sld [smem:[#allocation4 + %s84]]
    %s86 = scalar_lea.vmem [#allocation9], %s85
    %v87 = vld [vmem:[%s86] sm:$0x1]
    %88 = vst [vmem:[#allocation2 + $0x5] sm:$0x1] %v87
    %s89 = sadd.s32 %s59, 6
    %s90 = sld [smem:[#allocation4 + %s89]]
    %s91 = scalar_lea.vmem [#allocation9], %s90
    %v92 = vld [vmem:[%s91] sm:$0x1]
    %93 = vst [vmem:[#allocation2 + $0x6] sm:$0x1] %v92
    %s94 = sadd.s32 %s59, 7
    %s95 = sld [smem:[#allocation4 + %s94]]
    %s96 = scalar_lea.vmem [#allocation9], %s95
    %v97 = vld [vmem:[%s96] sm:$0x1]
    %98 = vst [vmem:[#allocation2 + $0x7] sm:$0x1] %v97
    %s99 = sadd.s32 %s59, 8
    %s100 = sld [smem:[#allocation4 + %s99]]
    %s101 = scalar_lea.vmem [#allocation9], %s100
    %v102 = vld [vmem:[%s101] sm:$0x1]
    %103 = vst [vmem:[#allocation2 + $0x8] sm:$0x1] %v102
    %s104 = sadd.s32 %s59, 9
    %s105 = sld [smem:[#allocation4 + %s104]]
    %s106 = scalar_lea.vmem [#allocation9], %s105
    %v107 = vld [vmem:[%s106] sm:$0x1]
    %108 = vst [vmem:[#allocation2 + $0x9] sm:$0x1] %v107
    %s109 = sadd.s32 %s59, 10
    %s110 = sld [smem:[#allocation4 + %s109]]
    %s111 = scalar_lea.vmem [#allocation9], %s110
    %v112 = vld [vmem:[%s111] sm:$0x1]
    %113 = vst [vmem:[#allocation2 + $0xa] sm:$0x1] %v112
    %s114 = sadd.s32 %s59, 11
    %s115 = sld [smem:[#allocation4 + %s114]]
    %s116 = scalar_lea.vmem [#allocation9], %s115
    %v117 = vld [vmem:[%s116] sm:$0x1]
    %118 = vst [vmem:[#allocation2 + $0xb] sm:$0x1] %v117
    %s119 = sadd.s32 %s59, 12
    %s120 = sld [smem:[#allocation4 + %s119]]
    %s121 = scalar_lea.vmem [#allocation9], %s120
    %v122 = vld [vmem:[%s121] sm:$0x1]
    %123 = vst [vmem:[#allocation2 + $0xc] sm:$0x1] %v122
    %s124 = sadd.s32 %s59, 13
    %s125 = sld [smem:[#allocation4 + %s124]]
    %s126 = scalar_lea.vmem [#allocation9], %s125
    %v127 = vld [vmem:[%s126] sm:$0x1]
    %128 = vst [vmem:[#allocation2 + $0xd] sm:$0x1] %v127
    %s129 = sadd.s32 %s59, 14
    %s130 = sld [smem:[#allocation4 + %s129]]
    %s131 = scalar_lea.vmem [#allocation9], %s130
    %v132 = vld [vmem:[%s131] sm:$0x1]
    %133 = vst [vmem:[#allocation2 + $0xe] sm:$0x1] %v132
    %s134 = sadd.s32 %s59, 15
    %s135 = sld [smem:[#allocation4 + %s134]]
    %s136 = scalar_lea.vmem [#allocation9], %s135
    %v137 = vld [vmem:[%s136] sm:$0x1]
    %138 = vst [vmem:[#allocation2 + $0xf] sm:$0x1] %v137
    %v139 = vld [vmem:[#allocation2] sm:$0xff]
    %v140 = vld [vmem:[#allocation2 + $0x8] sm:$0xff]
    %v141 = vld [vmem:[#allocation6] sm:$0xff]
    %v142 = vld [vmem:[#allocation6 + $0x8] sm:$0xff]
    %v143 = vmul.f32 %v139, %v141
    %v144 = vmul.f32 %v140, %v142
    %145 = vadd.xlane.f32.xlu0 %v143
    %v146 = vpop.xlane.xlu0 %145
    %147 = vadd.xlane.f32.xlu0 %v144
    %v148 = vpop.xlane.xlu0 %147
    %v149 = vmin.f32 %v146, 0.0
    %v150 = vmin.f32 %v148, 0.0
    %v151 = vand.u32 2147483647, %v146
    %v152 = vand.u32 2147483647, %v148
    %v153 = vsub.f32 0.0, %v151
    %v154 = vsub.f32 0.0, %v152
    %v155 = vmul.f32 %v153, 1.442695
    %v156 = vpow.pop %v155
    %v157 = vmul.f32 %v154, 1.442695
    %v158 = vpow.pop %v157
    %v159 = vadd.f32 %v156, 1.0
    %v160 = vlog2.pop %v159
    %v161 = vmul.f32 %v160, 0.6931472
    %v162 = vmul.f32 -0.5, %v156
    %v163 = vadd.f32 %v162, 1.0
    %v164 = vmul.f32 %v163, %v156
    %v165 = vand.u32 2147483647, %v156
    %vm166 = vcmp.lt.f32.partialorder %v165, 0.0004427343
    %v167 = vsel %vm166, %v164, %v161
    %v168 = vadd.f32 %v158, 1.0
    %v169 = vlog2.pop %v168
    %v170 = vmul.f32 %v169, 0.6931472
    %v171 = vmul.f32 -0.5, %v158
    %v172 = vadd.f32 %v171, 1.0
    %v173 = vmul.f32 %v172, %v158
    %v174 = vand.u32 2147483647, %v158
    %vm175 = vcmp.lt.f32.partialorder %v174, 0.0004427343
    %v176 = vsel %vm175, %v173, %v170
    %v177 = vsub.f32 %v149, %v167
    %v178 = vsub.f32 %v150, %v176
    %s179 = smul.u32 0, 64
    %s180 = sld [smem:[#allocation5 + %s179]]
    %s181 = scalar_lea.vmem [#allocation9], %s180
    %v182 = vld [vmem:[%s181] sm:$0x1]
    %183 = vst [vmem:[#allocation2] sm:$0x1] %v182
    %s184 = smul.u32 %s64, 4
    %s185 = sld [smem:[#allocation5 + %s184]]
    %s186 = scalar_lea.vmem [#allocation9], %s185
    %v187 = vld [vmem:[%s186] sm:$0x1]
    %188 = vst [vmem:[#allocation2 + $0x1] sm:$0x1] %v187
    %s189 = smul.u32 %s69, 4
    %s190 = sld [smem:[#allocation5 + %s189]]
    %s191 = scalar_lea.vmem [#allocation9], %s190
    %v192 = vld [vmem:[%s191] sm:$0x1]
    %193 = vst [vmem:[#allocation2 + $0x2] sm:$0x1] %v192
    %s194 = smul.u32 %s74, 4
    %s195 = sld [smem:[#allocation5 + %s194]]
    %s196 = scalar_lea.vmem [#allocation9], %s195
    %v197 = vld [vmem:[%s196] sm:$0x1]
    %198 = vst [vmem:[#allocation2 + $0x3] sm:$0x1] %v197
    %s199 = smul.u32 %s79, 4
    %s200 = sld [smem:[#allocation5 + %s199]]
    %s201 = scalar_lea.vmem [#allocation9], %s200
    %v202 = vld [vmem:[%s201] sm:$0x1]
    %203 = vst [vmem:[#allocation2 + $0x4] sm:$0x1] %v202
    %s204 = smul.u32 %s84, 4
    %s205 = sld [smem:[#allocation5 + %s204]]
    %s206 = scalar_lea.vmem [#allocation9], %s205
    %v207 = vld [vmem:[%s206] sm:$0x1]
    %208 = vst [vmem:[#allocation2 + $0x5] sm:$0x1] %v207
    %s209 = smul.u32 %s89, 4
    %s210 = sld [smem:[#allocation5 + %s209]]
    %s211 = scalar_lea.vmem [#allocation9], %s210
    %v212 = vld [vmem:[%s211] sm:$0x1]
    %213 = vst [vmem:[#allocation2 + $0x6] sm:$0x1] %v212
    %s214 = smul.u32 %s94, 4
    %s215 = sld [smem:[#allocation5 + %s214]]
    %s216 = scalar_lea.vmem [#allocation9], %s215
    %v217 = vld [vmem:[%s216] sm:$0x1]
    %218 = vst [vmem:[#allocation2 + $0x7] sm:$0x1] %v217
    %s219 = smul.u32 %s99, 4
    %s220 = sld [smem:[#allocation5 + %s219]]
    %s221 = scalar_lea.vmem [#allocation9], %s220
    %v222 = vld [vmem:[%s221] sm:$0x1]
    %223 = vst [vmem:[#allocation2 + $0x8] sm:$0x1] %v222
    %s224 = smul.u32 %s104, 4
    %s225 = sld [smem:[#allocation5 + %s224]]
    %s226 = scalar_lea.vmem [#allocation9], %s225
    %v227 = vld [vmem:[%s226] sm:$0x1]
    %228 = vst [vmem:[#allocation2 + $0x9] sm:$0x1] %v227
    %s229 = smul.u32 %s109, 4
    %s230 = sld [smem:[#allocation5 + %s229]]
    %s231 = scalar_lea.vmem [#allocation9], %s230
    %v232 = vld [vmem:[%s231] sm:$0x1]
    %233 = vst [vmem:[#allocation2 + $0xa] sm:$0x1] %v232
    %s234 = smul.u32 %s114, 4
    %s235 = sld [smem:[#allocation5 + %s234]]
    %s236 = scalar_lea.vmem [#allocation9], %s235
    %v237 = vld [vmem:[%s236] sm:$0x1]
    %238 = vst [vmem:[#allocation2 + $0xb] sm:$0x1] %v237
    %s239 = smul.u32 %s119, 4
    %s240 = sld [smem:[#allocation5 + %s239]]
    %s241 = scalar_lea.vmem [#allocation9], %s240
    %v242 = vld [vmem:[%s241] sm:$0x1]
    %243 = vst [vmem:[#allocation2 + $0xc] sm:$0x1] %v242
    %s244 = smul.u32 %s124, 4
    %s245 = sld [smem:[#allocation5 + %s244]]
    %s246 = scalar_lea.vmem [#allocation9], %s245
    %v247 = vld [vmem:[%s246] sm:$0x1]
    %248 = vst [vmem:[#allocation2 + $0xd] sm:$0x1] %v247
    %s249 = smul.u32 %s129, 4
    %s250 = sld [smem:[#allocation5 + %s249]]
    %s251 = scalar_lea.vmem [#allocation9], %s250
    %v252 = vld [vmem:[%s251] sm:$0x1]
    %253 = vst [vmem:[#allocation2 + $0xe] sm:$0x1] %v252
    %s254 = smul.u32 %s134, 4
    %s255 = sld [smem:[#allocation5 + %s254]]
    %s256 = scalar_lea.vmem [#allocation9], %s255
    %v257 = vld [vmem:[%s256] sm:$0x1]
    %258 = vst [vmem:[#allocation2 + $0xf] sm:$0x1] %v257
    %v259 = vld [vmem:[#allocation2] sm:$0xff]
    %v260 = vld [vmem:[#allocation2 + $0x8] sm:$0xff]
    %v261 = vld [vmem:[#allocation6] sm:$0xff]
    %v262 = vld [vmem:[#allocation6 + $0x8] sm:$0xff]
    %v263 = vmul.f32 %v259, %v261
    %v264 = vmul.f32 %v260, %v262
    %265 = vadd.xlane.f32.xlu0 %v263
    %v266 = vpop.xlane.xlu0 %265
    %267 = vadd.xlane.f32.xlu0 %v264
    %v268 = vpop.xlane.xlu0 %267
    %v269 = vsub.f32 0.0, %v266
    %v270 = vsub.f32 0.0, %v268
    %v271 = vmin.f32 %v269, 0.0
    %v272 = vmin.f32 %v270, 0.0
    %v273 = vand.u32 2147483647, %v269
    %v274 = vand.u32 2147483647, %v270
    %v275 = vsub.f32 0.0, %v273
    %v276 = vsub.f32 0.0, %v274
    %v277 = vmul.f32 %v275, 1.442695
    %v278 = vpow.pop %v277
    %v279 = vmul.f32 %v276, 1.442695
    %v280 = vpow.pop %v279
    %v281 = vadd.f32 %v278, 1.0
    %v282 = vlog2.pop %v281
    %v283 = vmul.f32 %v282, 0.6931472
    %v284 = vmul.f32 -0.5, %v278
    %v285 = vadd.f32 %v284, 1.0
    %v286 = vmul.f32 %v285, %v278
    %v287 = vand.u32 2147483647, %v278
    %vm288 = vcmp.lt.f32.partialorder %v287, 0.0004427343
    %v289 = vsel %vm288, %v286, %v283
    %v290 = vadd.f32 %v280, 1.0
    %v291 = vlog2.pop %v290
    %v292 = vmul.f32 %v291, 0.6931472
    %v293 = vmul.f32 -0.5, %v280
    %v294 = vadd.f32 %v293, 1.0
    %v295 = vmul.f32 %v294, %v280
    %v296 = vand.u32 2147483647, %v280
    %vm297 = vcmp.lt.f32.partialorder %v296, 0.0004427343
    %v298 = vsel %vm297, %v295, %v292
    %v299 = vsub.f32 %v271, %v289
    %v300 = vsub.f32 %v272, %v298
    %v301 = vadd.f32 %v177, %v299
    %v302 = vadd.f32 %v178, %v300
    %s303 = sadd.s32 %s179, 1
    %s304 = sld [smem:[#allocation5 + %s303]]
    %s305 = scalar_lea.vmem [#allocation9], %s304
    %v306 = vld [vmem:[%s305] sm:$0x1]
    %307 = vst [vmem:[#allocation2] sm:$0x1] %v306
    %s308 = sadd.s32 %s184, 1
    %s309 = sld [smem:[#allocation5 + %s308]]
    %s310 = scalar_lea.vmem [#allocation9], %s309
    %v311 = vld [vmem:[%s310] sm:$0x1]
    %312 = vst [vmem:[#allocation2 + $0x1] sm:$0x1] %v311
    %s313 = sadd.s32 %s189, 1
    %s314 = sld [smem:[#allocation5 + %s313]]
    %s315 = scalar_lea.vmem [#allocation9], %s314
    %v316 = vld [vmem:[%s315] sm:$0x1]
    %317 = vst [vmem:[#allocation2 + $0x2] sm:$0x1] %v316
    %s318 = sadd.s32 %s194, 1
    %s319 = sld [smem:[#allocation5 + %s318]]
    %s320 = scalar_lea.vmem [#allocation9], %s319
    %v321 = vld [vmem:[%s320] sm:$0x1]
    %322 = vst [vmem:[#allocation2 + $0x3] sm:$0x1] %v321
    %s323 = sadd.s32 %s199, 1
    %s324 = sld [smem:[#allocation5 + %s323]]
    %s325 = scalar_lea.vmem [#allocation9], %s324
    %v326 = vld [vmem:[%s325] sm:$0x1]
    %327 = vst [vmem:[#allocation2 + $0x4] sm:$0x1] %v326
    %s328 = sadd.s32 %s204, 1
    %s329 = sld [smem:[#allocation5 + %s328]]
    %s330 = scalar_lea.vmem [#allocation9], %s329
    %v331 = vld [vmem:[%s330] sm:$0x1]
    %332 = vst [vmem:[#allocation2 + $0x5] sm:$0x1] %v331
    %s333 = sadd.s32 %s209, 1
    %s334 = sld [smem:[#allocation5 + %s333]]
    %s335 = scalar_lea.vmem [#allocation9], %s334
    %v336 = vld [vmem:[%s335] sm:$0x1]
    %337 = vst [vmem:[#allocation2 + $0x6] sm:$0x1] %v336
    %s338 = sadd.s32 %s214, 1
    %s339 = sld [smem:[#allocation5 + %s338]]
    %s340 = scalar_lea.vmem [#allocation9], %s339
    %v341 = vld [vmem:[%s340] sm:$0x1]
    %342 = vst [vmem:[#allocation2 + $0x7] sm:$0x1] %v341
    %s343 = sadd.s32 %s219, 1
    %s344 = sld [smem:[#allocation5 + %s343]]
    %s345 = scalar_lea.vmem [#allocation9], %s344
    %v346 = vld [vmem:[%s345] sm:$0x1]
    %347 = vst [vmem:[#allocation2 + $0x8] sm:$0x1] %v346
    %s348 = sadd.s32 %s224, 1
    %s349 = sld [smem:[#allocation5 + %s348]]
    %s350 = scalar_lea.vmem [#allocation9], %s349
    %v351 = vld [vmem:[%s350] sm:$0x1]
    %352 = vst [vmem:[#allocation2 + $0x9] sm:$0x1] %v351
    %s353 = sadd.s32 %s229, 1
    %s354 = sld [smem:[#allocation5 + %s353]]
    %s355 = scalar_lea.vmem [#allocation9], %s354
    %v356 = vld [vmem:[%s355] sm:$0x1]
    %357 = vst [vmem:[#allocation2 + $0xa] sm:$0x1] %v356
    %s358 = sadd.s32 %s234, 1
    %s359 = sld [smem:[#allocation5 + %s358]]
    %s360 = scalar_lea.vmem [#allocation9], %s359
    %v361 = vld [vmem:[%s360] sm:$0x1]
    %362 = vst [vmem:[#allocation2 + $0xb] sm:$0x1] %v361
    %s363 = sadd.s32 %s239, 1
    %s364 = sld [smem:[#allocation5 + %s363]]
    %s365 = scalar_lea.vmem [#allocation9], %s364
    %v366 = vld [vmem:[%s365] sm:$0x1]
    %367 = vst [vmem:[#allocation2 + $0xc] sm:$0x1] %v366
    %s368 = sadd.s32 %s244, 1
    %s369 = sld [smem:[#allocation5 + %s368]]
    %s370 = scalar_lea.vmem [#allocation9], %s369
    %v371 = vld [vmem:[%s370] sm:$0x1]
    %372 = vst [vmem:[#allocation2 + $0xd] sm:$0x1] %v371
    %s373 = sadd.s32 %s249, 1
    %s374 = sld [smem:[#allocation5 + %s373]]
    %s375 = scalar_lea.vmem [#allocation9], %s374
    %v376 = vld [vmem:[%s375] sm:$0x1]
    %377 = vst [vmem:[#allocation2 + $0xe] sm:$0x1] %v376
    %s378 = sadd.s32 %s254, 1
    %s379 = sld [smem:[#allocation5 + %s378]]
    %s380 = scalar_lea.vmem [#allocation9], %s379
    %v381 = vld [vmem:[%s380] sm:$0x1]
    %382 = vst [vmem:[#allocation2 + $0xf] sm:$0x1] %v381
    %v383 = vld [vmem:[#allocation2] sm:$0xff]
    %v384 = vld [vmem:[#allocation2 + $0x8] sm:$0xff]
    %v385 = vld [vmem:[#allocation6] sm:$0xff]
    %v386 = vld [vmem:[#allocation6 + $0x8] sm:$0xff]
    %v387 = vmul.f32 %v383, %v385
    %v388 = vmul.f32 %v384, %v386
    %389 = vadd.xlane.f32.xlu0 %v387
    %v390 = vpop.xlane.xlu0 %389
    %391 = vadd.xlane.f32.xlu0 %v388
    %v392 = vpop.xlane.xlu0 %391
    %v393 = vsub.f32 0.0, %v390
    %v394 = vsub.f32 0.0, %v392
    %v395 = vmin.f32 %v393, 0.0
    %v396 = vmin.f32 %v394, 0.0
    %v397 = vand.u32 2147483647, %v393
    %v398 = vand.u32 2147483647, %v394
    %v399 = vsub.f32 0.0, %v397
    %v400 = vsub.f32 0.0, %v398
    %v401 = vmul.f32 %v399, 1.442695
    %v402 = vpow.pop %v401
    %v403 = vmul.f32 %v400, 1.442695
    %v404 = vpow.pop %v403
    %v405 = vadd.f32 %v402, 1.0
    %v406 = vlog2.pop %v405
    %v407 = vmul.f32 %v406, 0.6931472
    %v408 = vmul.f32 -0.5, %v402
    %v409 = vadd.f32 %v408, 1.0
    %v410 = vmul.f32 %v409, %v402
    %v411 = vand.u32 2147483647, %v402
    %vm412 = vcmp.lt.f32.partialorder %v411, 0.0004427343
    %v413 = vsel %vm412, %v410, %v407
    %v414 = vadd.f32 %v404, 1.0
    %v415 = vlog2.pop %v414
    %v416 = vmul.f32 %v415, 0.6931472
    %v417 = vmul.f32 -0.5, %v404
    %v418 = vadd.f32 %v417, 1.0
    %v419 = vmul.f32 %v418, %v404
    %v420 = vand.u32 2147483647, %v404
    %vm421 = vcmp.lt.f32.partialorder %v420, 0.0004427343
    %v422 = vsel %vm421, %v419, %v416
    %v423 = vsub.f32 %v395, %v413
    %v424 = vsub.f32 %v396, %v422
    %v425 = vadd.f32 %v301, %v423
    %v426 = vadd.f32 %v302, %v424
    %s427 = sadd.s32 %s179, 2
    %s428 = sld [smem:[#allocation5 + %s427]]
    %s429 = scalar_lea.vmem [#allocation9], %s428
    %v430 = vld [vmem:[%s429] sm:$0x1]
    %431 = vst [vmem:[#allocation2] sm:$0x1] %v430
    %s432 = sadd.s32 %s184, 2
    %s433 = sld [smem:[#allocation5 + %s432]]
    %s434 = scalar_lea.vmem [#allocation9], %s433
    %v435 = vld [vmem:[%s434] sm:$0x1]
    %436 = vst [vmem:[#allocation2 + $0x1] sm:$0x1] %v435
    %s437 = sadd.s32 %s189, 2
    %s438 = sld [smem:[#allocation5 + %s437]]
    %s439 = scalar_lea.vmem [#allocation9], %s438
    %v440 = vld [vmem:[%s439] sm:$0x1]
    %441 = vst [vmem:[#allocation2 + $0x2] sm:$0x1] %v440
    %s442 = sadd.s32 %s194, 2
    %s443 = sld [smem:[#allocation5 + %s442]]
    %s444 = scalar_lea.vmem [#allocation9], %s443
    %v445 = vld [vmem:[%s444] sm:$0x1]
    %446 = vst [vmem:[#allocation2 + $0x3] sm:$0x1] %v445
    %s447 = sadd.s32 %s199, 2
    %s448 = sld [smem:[#allocation5 + %s447]]
    %s449 = scalar_lea.vmem [#allocation9], %s448
    %v450 = vld [vmem:[%s449] sm:$0x1]
    %451 = vst [vmem:[#allocation2 + $0x4] sm:$0x1] %v450
    %s452 = sadd.s32 %s204, 2
    %s453 = sld [smem:[#allocation5 + %s452]]
    %s454 = scalar_lea.vmem [#allocation9], %s453
    %v455 = vld [vmem:[%s454] sm:$0x1]
    %456 = vst [vmem:[#allocation2 + $0x5] sm:$0x1] %v455
    %s457 = sadd.s32 %s209, 2
    %s458 = sld [smem:[#allocation5 + %s457]]
    %s459 = scalar_lea.vmem [#allocation9], %s458
    %v460 = vld [vmem:[%s459] sm:$0x1]
    %461 = vst [vmem:[#allocation2 + $0x6] sm:$0x1] %v460
    %s462 = sadd.s32 %s214, 2
    %s463 = sld [smem:[#allocation5 + %s462]]
    %s464 = scalar_lea.vmem [#allocation9], %s463
    %v465 = vld [vmem:[%s464] sm:$0x1]
    %466 = vst [vmem:[#allocation2 + $0x7] sm:$0x1] %v465
    %s467 = sadd.s32 %s219, 2
    %s468 = sld [smem:[#allocation5 + %s467]]
    %s469 = scalar_lea.vmem [#allocation9], %s468
    %v470 = vld [vmem:[%s469] sm:$0x1]
    %471 = vst [vmem:[#allocation2 + $0x8] sm:$0x1] %v470
    %s472 = sadd.s32 %s224, 2
    %s473 = sld [smem:[#allocation5 + %s472]]
    %s474 = scalar_lea.vmem [#allocation9], %s473
    %v475 = vld [vmem:[%s474] sm:$0x1]
    %476 = vst [vmem:[#allocation2 + $0x9] sm:$0x1] %v475
    %s477 = sadd.s32 %s229, 2
    %s478 = sld [smem:[#allocation5 + %s477]]
    %s479 = scalar_lea.vmem [#allocation9], %s478
    %v480 = vld [vmem:[%s479] sm:$0x1]
    %481 = vst [vmem:[#allocation2 + $0xa] sm:$0x1] %v480
    %s482 = sadd.s32 %s234, 2
    %s483 = sld [smem:[#allocation5 + %s482]]
    %s484 = scalar_lea.vmem [#allocation9], %s483
    %v485 = vld [vmem:[%s484] sm:$0x1]
    %486 = vst [vmem:[#allocation2 + $0xb] sm:$0x1] %v485
    %s487 = sadd.s32 %s239, 2
    %s488 = sld [smem:[#allocation5 + %s487]]
    %s489 = scalar_lea.vmem [#allocation9], %s488
    %v490 = vld [vmem:[%s489] sm:$0x1]
    %491 = vst [vmem:[#allocation2 + $0xc] sm:$0x1] %v490
    %s492 = sadd.s32 %s244, 2
    %s493 = sld [smem:[#allocation5 + %s492]]
    %s494 = scalar_lea.vmem [#allocation9], %s493
    %v495 = vld [vmem:[%s494] sm:$0x1]
    %496 = vst [vmem:[#allocation2 + $0xd] sm:$0x1] %v495
    %s497 = sadd.s32 %s249, 2
    %s498 = sld [smem:[#allocation5 + %s497]]
    %s499 = scalar_lea.vmem [#allocation9], %s498
    %v500 = vld [vmem:[%s499] sm:$0x1]
    %501 = vst [vmem:[#allocation2 + $0xe] sm:$0x1] %v500
    %s502 = sadd.s32 %s254, 2
    %s503 = sld [smem:[#allocation5 + %s502]]
    %s504 = scalar_lea.vmem [#allocation9], %s503
    %v505 = vld [vmem:[%s504] sm:$0x1]
    %506 = vst [vmem:[#allocation2 + $0xf] sm:$0x1] %v505
    %v507 = vld [vmem:[#allocation2] sm:$0xff]
    %v508 = vld [vmem:[#allocation2 + $0x8] sm:$0xff]
    %v509 = vld [vmem:[#allocation6] sm:$0xff]
    %v510 = vld [vmem:[#allocation6 + $0x8] sm:$0xff]
    %v511 = vmul.f32 %v507, %v509
    %v512 = vmul.f32 %v508, %v510
    %513 = vadd.xlane.f32.xlu0 %v511
    %v514 = vpop.xlane.xlu0 %513
    %515 = vadd.xlane.f32.xlu0 %v512
    %v516 = vpop.xlane.xlu0 %515
    %v517 = vsub.f32 0.0, %v514
    %v518 = vsub.f32 0.0, %v516
    %v519 = vmin.f32 %v517, 0.0
    %v520 = vmin.f32 %v518, 0.0
    %v521 = vand.u32 2147483647, %v517
    %v522 = vand.u32 2147483647, %v518
    %v523 = vsub.f32 0.0, %v521
    %v524 = vsub.f32 0.0, %v522
    %v525 = vmul.f32 %v523, 1.442695
    %v526 = vpow.pop %v525
    %v527 = vmul.f32 %v524, 1.442695
    %v528 = vpow.pop %v527
    %v529 = vadd.f32 %v526, 1.0
    %v530 = vlog2.pop %v529
    %v531 = vmul.f32 %v530, 0.6931472
    %v532 = vmul.f32 -0.5, %v526
    %v533 = vadd.f32 %v532, 1.0
    %v534 = vmul.f32 %v533, %v526
    %v535 = vand.u32 2147483647, %v526
    %vm536 = vcmp.lt.f32.partialorder %v535, 0.0004427343
    %v537 = vsel %vm536, %v534, %v531
    %v538 = vadd.f32 %v528, 1.0
    %v539 = vlog2.pop %v538
    %v540 = vmul.f32 %v539, 0.6931472
    %v541 = vmul.f32 -0.5, %v528
    %v542 = vadd.f32 %v541, 1.0
    %v543 = vmul.f32 %v542, %v528
    %v544 = vand.u32 2147483647, %v528
    %vm545 = vcmp.lt.f32.partialorder %v544, 0.0004427343
    %v546 = vsel %vm545, %v543, %v540
    %v547 = vsub.f32 %v519, %v537
    %v548 = vsub.f32 %v520, %v546
    %v549 = vadd.f32 %v425, %v547
    %v550 = vadd.f32 %v426, %v548
    %s551 = sadd.s32 %s179, 3
    %s552 = sld [smem:[#allocation5 + %s551]]
    %s553 = scalar_lea.vmem [#allocation9], %s552
    %v554 = vld [vmem:[%s553] sm:$0x1]
    %555 = vst [vmem:[#allocation2] sm:$0x1] %v554
    %s556 = sadd.s32 %s184, 3
    %s557 = sld [smem:[#allocation5 + %s556]]
    %s558 = scalar_lea.vmem [#allocation9], %s557
    %v559 = vld [vmem:[%s558] sm:$0x1]
    %560 = vst [vmem:[#allocation2 + $0x1] sm:$0x1] %v559
    %s561 = sadd.s32 %s189, 3
    %s562 = sld [smem:[#allocation5 + %s561]]
    %s563 = scalar_lea.vmem [#allocation9], %s562
    %v564 = vld [vmem:[%s563] sm:$0x1]
    %565 = vst [vmem:[#allocation2 + $0x2] sm:$0x1] %v564
    %s566 = sadd.s32 %s194, 3
    %s567 = sld [smem:[#allocation5 + %s566]]
    %s568 = scalar_lea.vmem [#allocation9], %s567
    %v569 = vld [vmem:[%s568] sm:$0x1]
    %570 = vst [vmem:[#allocation2 + $0x3] sm:$0x1] %v569
    %s571 = sadd.s32 %s199, 3
    %s572 = sld [smem:[#allocation5 + %s571]]
    %s573 = scalar_lea.vmem [#allocation9], %s572
    %v574 = vld [vmem:[%s573] sm:$0x1]
    %575 = vst [vmem:[#allocation2 + $0x4] sm:$0x1] %v574
    %s576 = sadd.s32 %s204, 3
    %s577 = sld [smem:[#allocation5 + %s576]]
    %s578 = scalar_lea.vmem [#allocation9], %s577
    %v579 = vld [vmem:[%s578] sm:$0x1]
    %580 = vst [vmem:[#allocation2 + $0x5] sm:$0x1] %v579
    %s581 = sadd.s32 %s209, 3
    %s582 = sld [smem:[#allocation5 + %s581]]
    %s583 = scalar_lea.vmem [#allocation9], %s582
    %v584 = vld [vmem:[%s583] sm:$0x1]
    %585 = vst [vmem:[#allocation2 + $0x6] sm:$0x1] %v584
    %s586 = sadd.s32 %s214, 3
    %s587 = sld [smem:[#allocation5 + %s586]]
    %s588 = scalar_lea.vmem [#allocation9], %s587
    %v589 = vld [vmem:[%s588] sm:$0x1]
    %590 = vst [vmem:[#allocation2 + $0x7] sm:$0x1] %v589
    %s591 = sadd.s32 %s219, 3
    %s592 = sld [smem:[#allocation5 + %s591]]
    %s593 = scalar_lea.vmem [#allocation9], %s592
    %v594 = vld [vmem:[%s593] sm:$0x1]
    %595 = vst [vmem:[#allocation2 + $0x8] sm:$0x1] %v594
    %s596 = sadd.s32 %s224, 3
    %s597 = sld [smem:[#allocation5 + %s596]]
    %s598 = scalar_lea.vmem [#allocation9], %s597
    %v599 = vld [vmem:[%s598] sm:$0x1]
    %600 = vst [vmem:[#allocation2 + $0x9] sm:$0x1] %v599
    %s601 = sadd.s32 %s229, 3
    %s602 = sld [smem:[#allocation5 + %s601]]
    %s603 = scalar_lea.vmem [#allocation9], %s602
    %v604 = vld [vmem:[%s603] sm:$0x1]
    %605 = vst [vmem:[#allocation2 + $0xa] sm:$0x1] %v604
    %s606 = sadd.s32 %s234, 3
    %s607 = sld [smem:[#allocation5 + %s606]]
    %s608 = scalar_lea.vmem [#allocation9], %s607
    %v609 = vld [vmem:[%s608] sm:$0x1]
    %610 = vst [vmem:[#allocation2 + $0xb] sm:$0x1] %v609
    %s611 = sadd.s32 %s239, 3
    %s612 = sld [smem:[#allocation5 + %s611]]
    %s613 = scalar_lea.vmem [#allocation9], %s612
    %v614 = vld [vmem:[%s613] sm:$0x1]
    %615 = vst [vmem:[#allocation2 + $0xc] sm:$0x1] %v614
    %s616 = sadd.s32 %s244, 3
    %s617 = sld [smem:[#allocation5 + %s616]]
    %s618 = scalar_lea.vmem [#allocation9], %s617
    %v619 = vld [vmem:[%s618] sm:$0x1]
    %620 = vst [vmem:[#allocation2 + $0xd] sm:$0x1] %v619
    %s621 = sadd.s32 %s249, 3
    %s622 = sld [smem:[#allocation5 + %s621]]
    %s623 = scalar_lea.vmem [#allocation9], %s622
    %v624 = vld [vmem:[%s623] sm:$0x1]
    %625 = vst [vmem:[#allocation2 + $0xe] sm:$0x1] %v624
    %s626 = sadd.s32 %s254, 3
    %s627 = sld [smem:[#allocation5 + %s626]]
    %s628 = scalar_lea.vmem [#allocation9], %s627
    %v629 = vld [vmem:[%s628] sm:$0x1]
    %630 = vst [vmem:[#allocation2 + $0xf] sm:$0x1] %v629
    %v631 = vld [vmem:[#allocation2] sm:$0xff]
    %v632 = vld [vmem:[#allocation2 + $0x8] sm:$0xff]
    %v633 = vld [vmem:[#allocation6] sm:$0xff]
    %v634 = vld [vmem:[#allocation6 + $0x8] sm:$0xff]
    %v635 = vmul.f32 %v631, %v633
    %v636 = vmul.f32 %v632, %v634
    %637 = vadd.xlane.f32.xlu0 %v635
    %v638 = vpop.xlane.xlu0 %637
    %639 = vadd.xlane.f32.xlu0 %v636
    %v640 = vpop.xlane.xlu0 %639
    %v641 = vsub.f32 0.0, %v638
    %v642 = vsub.f32 0.0, %v640
    %v643 = vmin.f32 %v641, 0.0
    %v644 = vmin.f32 %v642, 0.0
    %v645 = vand.u32 2147483647, %v641
    %v646 = vand.u32 2147483647, %v642
    %v647 = vsub.f32 0.0, %v645
    %v648 = vsub.f32 0.0, %v646
    %v649 = vmul.f32 %v647, 1.442695
    %v650 = vpow.pop %v649
    %v651 = vmul.f32 %v648, 1.442695
    %v652 = vpow.pop %v651
    %v653 = vadd.f32 %v650, 1.0
    %v654 = vlog2.pop %v653
    %v655 = vmul.f32 %v654, 0.6931472
    %v656 = vmul.f32 -0.5, %v650
    %v657 = vadd.f32 %v656, 1.0
    %v658 = vmul.f32 %v657, %v650
    %v659 = vand.u32 2147483647, %v650
    %vm660 = vcmp.lt.f32.partialorder %v659, 0.0004427343
    %v661 = vsel %vm660, %v658, %v655
    %v662 = vadd.f32 %v652, 1.0
    %v663 = vlog2.pop %v662
    %v664 = vmul.f32 %v663, 0.6931472
    %v665 = vmul.f32 -0.5, %v652
    %v666 = vadd.f32 %v665, 1.0
    %v667 = vmul.f32 %v666, %v652
    %v668 = vand.u32 2147483647, %v652
    %vm669 = vcmp.lt.f32.partialorder %v668, 0.0004427343
    %v670 = vsel %vm669, %v667, %v664
    %v671 = vsub.f32 %v643, %v661
    %v672 = vsub.f32 %v644, %v670
    %v673 = vadd.f32 %v549, %v671
    %v674 = vadd.f32 %v550, %v672
    %v675 = vlaneseq
    %v676 = vshrl.u32 %v675, 7
    %v677 = vadd.s32 %v676, 8
    %v678 = vstv %s59
    %v679 = vadd.s32 %v678, %v676
    %v680 = vadd.s32 %v678, %v677
    %vm681 = vcmp.lt.s32.totalorder %v679, 16
    %vm682 = vcmp.lt.s32.totalorder %v680, 16
    %v683 = vsel %vm681, %v673, 0.0
    %v684 = vsel %vm682, %v674, 0.0
    %vm685 = vcmask 7168
    %v686 = vsel %vm685, %v683, 0.0
    %v687 = vsel %vm685, %v684, 0.0
    %v688 = vadd.f32 %v686, %v687
    %689 = vadd.xlane.f32.xlu0 %v688
    %v690 = vpop.xlane.xlu0 %689
    %v691 = vrot.slane %v690, 4
    %v692 = vadd.f32 %v690, %v691
    %v693 = vrot.slane %v692, 2
    %v694 = vadd.f32 %v692, %v693
    %v695 = vrot.slane %v694, 1
    %v696 = vadd.f32 %v694, %v695
    %s697 = vtos %v696
    %s698 = ssub.f32 0.0, %s697
    %v699 = vstv %s698
    %700 = vst [vmem:[#allocation11] sm:$0xff] %v699
    // Predicated region
    $region18: #{tpu_custom_call.1} parent=1 // pred_check
      _
    $region19: #{tpu_custom_call.1} parent=1 // pred_check_branch
      %702 = sbr.rel (0) target = $region21
    $region20: #{tpu_custom_call.1} parent=1 // pred_region
      %704 = vsyncadd [#allocation8], 0
      %s706 = sshll.u32 [#allocation11], 4
      %s707 = int_to_ptr.vmem [resolvable:$true] %s706
      %s708 = sshll.u32 %s4, 4
      %s709 = int_to_ptr.hbm [resolvable:$true] %s708
      %711 = dma.vmem_to_hbm [thread:$0]  %s707, 128, %s709, [#allocation8]
    $region21: #{tpu_custom_call.1} parent=1 // pred_fallthru
      _
    // Predicated region
    $region22: #{tpu_custom_call.1} parent=1 // pred_check
      _
    $region23: #{tpu_custom_call.1} parent=1 // pred_check_branch
      %713 = sbr.rel (0) target = $region25
    $region24: #{tpu_custom_call.1} parent=1 // pred_region
      %715 = dma.done [#allocation8], 128
    $region25: #{tpu_custom_call.1} parent=1 // pred_fallthru
      _
    %716 = vsyncpa [#allocation7], 1
    %717 = vsyncpa [#allocation10], 1
    %718 = vsyncpa [#allocation8], 1

</llo_original>
